<compile_context>
chip_gen: v7x
topology: tpu7x:2x2x1
jax: 0.10.0
libtpu: 0.0.40
codegen_flags: <defaults>
</compile_context>

<pallas_src>
import functools

import jax
import jax.numpy as jnp
from jax import lax
from jax.experimental import pallas as pl
from jax.experimental.pallas import tpu as pltpu


# ----------------------------- in-kernel helpers -----------------------------

def _shift_cols(a, k):
    """out[:, j] = a[:, j + k], zero-filled out of range. k is a static int."""
    if k == 0:
        return a
    rows, cols = a.shape
    if k > 0:
        return jnp.concatenate([a[:, k:], jnp.zeros((rows, k), a.dtype)], axis=1)
    return jnp.concatenate([jnp.zeros((rows, -k), a.dtype), a[:, :cols + k]], axis=1)


def _shift_rows(a, k):
    """out[i, :] = a[i + k, :], zero-filled out of range. k is a static int."""
    if k == 0:
        return a
    rows, cols = a.shape
    if k > 0:
        return jnp.concatenate([a[k:, :], jnp.zeros((k, cols), a.dtype)], axis=0)
    return jnp.concatenate([jnp.zeros((-k, cols), a.dtype), a[:rows + k, :]], axis=0)


# --------------------------------- kernel ------------------------------------

def _inverted_residual_kernel(x_ref, wpw_ref, b1_ref, wdw_ref, b2_ref,
                              wpl_ref, b3_ref, out_ref,
                              *, hidden, use_res, expand):
    """TB images per grid step, all activations lane-dense (TB*H, W*C)."""
    TB, H, wc_in = x_ref.shape
    M = TB * H
    wc_hid = wdw_ref.shape[1]                     # W * hidden
    dw_dtype = wdw_ref.dtype                      # bf16 on v6e/v7x, f32 on v5e

    x = x_ref[...].reshape(M, wc_in)

    # ---- 1x1 pointwise expand (BN scale pre-folded) + bias + ReLU6 (MXU) ----
    if expand:
        h1 = jnp.dot(x.astype(jnp.bfloat16), wpw_ref[...],
                     preferred_element_type=jnp.float32)       # (M, W*hidden)
        h1 = jnp.clip(h1 + b1_ref[...], 0.0, 6.0)
    else:
        h1 = x.astype(jnp.float32)                # expand_ratio == 1 path
    h1 = h1.astype(dw_dtype)

    # Masks so row shifts don't leak between the TB images stacked in the slab.
    if TB > 1:
        row = lax.broadcasted_iota(jnp.int32, (M, 1), 0) % H
        mask_up = row > 0                          # valid when reading row i-1
        mask_dn = row < (H - 1)                    # valid when reading row i+1

    # ---- 3x3 depthwise, stride=1, pad=1 (in-register; BN scale in the taps) ----
    # TODO(synk): stride=2 depthwise variant not implemented in this kernel.
    acc = jnp.zeros((M, wc_hid), dw_dtype)
    for kw in range(3):
        col = _shift_cols(h1, (kw - 1) * hidden)   # W shift hoisted across kh
        for kh in range(3):
            shifted = _shift_rows(col, kh - 1)
            if TB > 1 and kh != 1:
                m = mask_up if kh == 0 else mask_dn
                shifted = jnp.where(m, shifted, jnp.zeros_like(shifted))
            w_tap = wdw_ref[kh * 3 + kw, :][None, :]            # (1, W*hidden)
            acc = acc + shifted * w_tap
    h2 = jnp.clip(acc.astype(jnp.float32) + b2_ref[...], 0.0, 6.0)

    # ---- 1x1 pointwise-linear (BN scale pre-folded) + bias, lane-dense ----
    y = jnp.dot(h2.astype(jnp.bfloat16), wpl_ref[...],
                preferred_element_type=jnp.float32)             # (M, W*oup)
    y = y + b3_ref[...]

    if use_res:
        y = y + x.astype(jnp.float32)

    out_ref[...] = y.astype(out_ref.dtype).reshape(TB, H, -1)


# ------------------------- wrapper-side preparation ---------------------------

def _block_diag(w, nblk):
    k, n = w.shape
    eye = jnp.eye(nblk, dtype=w.dtype)
    return jnp.einsum('pq,kn->pkqn', eye, w).reshape(nblk * k, nblk * n)


def _tile_c(v, nblk):                              # per-channel -> per-(w, channel)
    return jnp.tile(jnp.asarray(v).reshape(1, -1), (1, nblk))


def _tpu_kind():
    try:
        return jax.devices()[0].device_kind.lower()
    except Exception:
        return ""


def choose_dw_dtype():
    kind = _tpu_kind()
    # v5e (and older) have no bf16 VPU -> keep the depthwise in f32 there.
    if any(v in kind for v in ("v2", "v3", "v4", "v5")):
        return jnp.float32
    return jnp.bfloat16                            # v6e / v7x


def choose_batch_tile(batch):
    kind = _tpu_kind()
    # v7x has 2 TensorCores/chip: keep >= 2 parallel grid steps.
    # v5e/v6e are single-TC: collapse to one step (no per-step overhead).
    target_steps = 2 if "v7" in kind else 1
    return max(1, -(-batch // target_steps))


def prepare_inverted_residual_params(params, *, W, dw_dtype):
    """One-time layout plumbing (cache the result): BN scales folded into the
    weights, block-diagonal 1x1 weights, lane-dense taps and biases."""
    wpw, s1, b1, wdw, s2, b2, wpl, s3, b3 = params
    hidden = wdw.shape[-1]
    wpw_s = wpw * s1.reshape(1, -1)                # fold BN1 scale into columns
    wpl_s = wpl * s3.reshape(1, -1)                # fold BN3 scale into columns
    wdw_s = wdw * s2.reshape(1, 1, -1)             # fold BN2 scale into the taps
    wpw_bd = _block_diag(wpw_s, W).astype(jnp.bfloat16)       # (W*Cin, W*hidden)
    wpl_bd = _block_diag(wpl_s, W).astype(jnp.bfloat16)       # (W*hidden, W*oup)
    wdw_flat = jnp.broadcast_to(
        wdw_s[:, :, None, :], (3, 3, W, hidden)
    ).reshape(9, W * hidden).astype(dw_dtype)                 # (9, W*hidden)
    b1f = _tile_c(b1, W).astype(jnp.float32)                  # (1, W*hidden)
    b2f = _tile_c(b2, W).astype(jnp.float32)                  # (1, W*hidden)
    b3f = _tile_c(b3, W).astype(jnp.float32)                  # (1, W*oup)
    return (wpw_bd, b1f, wdw_flat, b2f, wpl_bd, b3f)


def inverted_residual_forward(x_nhwc, prepared, *, stride, use_res, expand, tb):
    assert stride == 1, "kernel implements the stride=1 block"
    wpw_bd, b1f, wdw_flat, b2f, wpl_bd, b3f = prepared
    B, H, W, cin = x_nhwc.shape
    hidden = wdw_flat.shape[1] // W
    oup = wpl_bd.shape[1] // W

    tb = max(1, min(tb, B))
    b_pad = -(-B // tb) * tb
    x_flat = x_nhwc.reshape(B, H, W * cin)                    # (B, H, W*Cin)
    if b_pad != B:
        x_flat = jnp.pad(x_flat, ((0, b_pad - B), (0, 0), (0, 0)))
    steps = b_pad // tb

    kernel = functools.partial(_inverted_residual_kernel,
                               hidden=hidden, use_res=use_res, expand=expand)

    def const_spec(arr):
        nd = arr.ndim
        return pl.BlockSpec(arr.shape, lambda b, _nd=nd: (0,) * _nd)

    # Executed-work cost estimate (block-diagonal matmuls do ~W x the logical
    # 1x1-conv flops; count what the MXU actually does).
    m_total = b_pad * H
    flops = (2 * m_total * (W * cin) * (W * hidden)
             + 2 * m_total * (W * hidden) * (W * oup)
             + 2 * m_total * (W * hidden) * 9)
    bytes_accessed = (x_flat.size * 4 + b_pad * H * W * oup * 4
                      + (wpw_bd.size + wpl_bd.size) * 2
                      + wdw_flat.size * jnp.dtype(wdw_flat.dtype).itemsize
                      + (b1f.size + b2f.size + b3f.size) * 4)
    cost = pl.CostEstimate(flops=flops, transcendentals=0,
                           bytes_accessed=bytes_accessed)

    out_flat = pl.pallas_call(
        kernel,
        out_shape=jax.ShapeDtypeStruct((b_pad, H, W * oup), x_nhwc.dtype),
        grid_spec=pltpu.PrefetchScalarGridSpec(
            num_scalar_prefetch=0,
            grid=(steps,),
            in_specs=[
                pl.BlockSpec((tb, H, W * cin), lambda b: (b, 0, 0)),
                const_spec(wpw_bd), const_spec(b1f),
                const_spec(wdw_flat), const_spec(b2f),
                const_spec(wpl_bd), const_spec(b3f),
            ],
            out_specs=pl.BlockSpec((tb, H, W * oup), lambda b: (b, 0, 0)),
        ),
        compiler_params=pltpu.CompilerParams(
            dimension_semantics=("parallel",)),
        cost_estimate=cost,
    )(x_flat, wpw_bd, b1f, wdw_flat, b2f, wpl_bd, b3f)

    out = out_flat.reshape(b_pad, H, W, oup)
    if b_pad != B:
        out = out[:B]
    return out


# ------------------------------ init helpers ---------------------------------

def trunc_normal(key, shape, std=0.02, a=-0.04, b=0.04):
    # matches torch trunc_normal_(std=0.02, a=-0.04, b=0.04)
    return std * jax.random.truncated_normal(key, a / std, b / std, shape, jnp.float32)


def bn_fold(num_features, eps=1e-5):
    gamma = jnp.ones((num_features,), jnp.float32)
    beta = jnp.zeros((num_features,), jnp.float32)
    mean = jnp.zeros((num_features,), jnp.float32)
    var = jnp.ones((num_features,), jnp.float32)
    scale = gamma / jnp.sqrt(var + eps)
    shift = beta - mean * scale
    return scale.reshape(1, -1), shift.reshape(1, -1)


if __name__ == "__main__":
    # InvertedResidual(inp=8, oup=8, stride=1, expand_ratio=6, bias=False, act=ReLU6)
    B, Cin, H, W = 2, 8, 16, 16
    oup, stride, expand_ratio = 8, 1, 6
    hidden = int(round(Cin * expand_ratio))          # 48
    use_res = (stride == 1 and Cin == oup)
    expand = (expand_ratio != 1)

    key = jax.random.PRNGKey(0)
    kx, k1, k2, k3 = jax.random.split(key, 4)

    # PyTorch-style NCHW input -> NHWC for the kernel wrapper
    x_nchw = jax.random.normal(kx, (B, Cin, H, W), jnp.float32)
    x = jnp.transpose(x_nchw, (0, 2, 3, 1))

    # weights in torch layouts, then transposed to kernel layouts
    wpw_t = trunc_normal(k1, (hidden, Cin, 1, 1))            # (hidden, Cin, 1, 1)
    wpw = jnp.transpose(wpw_t[:, :, 0, 0], (1, 0))           # (Cin, hidden)
    wdw_t = trunc_normal(k2, (hidden, 1, 3, 3))              # (hidden, 1, 3, 3)
    wdw = jnp.transpose(wdw_t[:, 0, :, :], (1, 2, 0))        # (3, 3, hidden)
    wpl_t = trunc_normal(k3, (oup, hidden, 1, 1))            # (oup, hidden, 1, 1)
    wpl = jnp.transpose(wpl_t[:, :, 0, 0], (1, 0))           # (hidden, oup)

    s1, b1 = bn_fold(hidden)
    s2, b2 = bn_fold(hidden)
    s3, b3 = bn_fold(oup)
    params = (wpw, s1, b1, wdw, s2, b2, wpl, s3, b3)

    # One-time, cached layout plumbing + per-chip configuration.
    dw_dtype = choose_dw_dtype()
    tb = choose_batch_tile(B)
    prepared = prepare_inverted_residual_params(params, W=W, dw_dtype=dw_dtype)
    forward = jax.jit(functools.partial(
        inverted_residual_forward, stride=stride, use_res=use_res,
        expand=expand, tb=tb))

    out = jax.block_until_ready(forward(x, prepared))

    # pure-JAX full-precision reference of the PyTorch block forward
    def ref(xv):
        h = jnp.einsum('bhwc,cd->bhwd', xv, wpw, precision=lax.Precision.HIGHEST)
        h = jnp.clip(h * s1[0] + b1[0], 0.0, 6.0)
        hp = jnp.pad(h, ((0, 0), (1, 1), (1, 1), (0, 0)))
        dw = lax.conv_general_dilated(
            hp, wdw.reshape(3, 3, 1, hidden), (1, 1), 'VALID',
            dimension_numbers=('NHWC', 'HWIO', 'NHWC'),
            feature_group_count=hidden, precision=lax.Precision.HIGHEST)
        dw = jnp.clip(dw * s2[0] + b2[0], 0.0, 6.0)
        y = jnp.einsum('bhwc,cd->bhwd', dw, wpl, precision=lax.Precision.HIGHEST)
        y = y * s3[0] + b3[0]
        return xv + y if use_res else y

    ref_out = ref(x)
    assert out.shape == (B, H, W, oup)
    max_err = float(jnp.max(jnp.abs(out - ref_out)))
    assert jnp.allclose(out, ref_out, atol=5e-3, rtol=5e-3), max_err
    print("KERNEL_OK")
</pallas_src>

<mosaic_0001>
module attributes {stable_mosaic.version = 11 : i64} {
  func.func @_inverted_residual_kernel(%arg0: i32, %arg1: memref<2x16x128xf32, #tpu.memory_space<vmem>>, %arg2: memref<128x768xbf16, #tpu.memory_space<vmem>>, %arg3: memref<1x768xf32, #tpu.memory_space<vmem>>, %arg4: memref<9x768xbf16, #tpu.memory_space<vmem>>, %arg5: memref<1x768xf32, #tpu.memory_space<vmem>>, %arg6: memref<768x128xbf16, #tpu.memory_space<vmem>>, %arg7: memref<1x128xf32, #tpu.memory_space<vmem>>, %arg8: memref<2x16x128xf32, #tpu.memory_space<vmem>>) attributes {dimension_semantics = [#tpu.dimension_semantics<parallel>], iteration_bounds = array<i64: 1>, scalar_prefetch = 0 : i64, scratch_operands = 0 : i64, tpu.core_type = #tpu.core_type<tc>, window_params = [{transform_indices = @transform_0, window_bounds = array<i64: 2, 16, 128>}, {pipeline_mode = #tpu.pipeline_mode<synchronous>, transform_indices = @transform_1, window_bounds = array<i64: 128, 768>}, {pipeline_mode = #tpu.pipeline_mode<synchronous>, transform_indices = @transform_2, window_bounds = array<i64: 1, 768>}, {pipeline_mode = #tpu.pipeline_mode<synchronous>, transform_indices = @transform_3, window_bounds = array<i64: 9, 768>}, {pipeline_mode = #tpu.pipeline_mode<synchronous>, transform_indices = @transform_4, window_bounds = array<i64: 1, 768>}, {pipeline_mode = #tpu.pipeline_mode<synchronous>, transform_indices = @transform_5, window_bounds = array<i64: 768, 128>}, {pipeline_mode = #tpu.pipeline_mode<synchronous>, transform_indices = @transform_6, window_bounds = array<i64: 1, 128>}, {transform_indices = @transform_7, window_bounds = array<i64: 2, 16, 128>}]} {
    %c0 = arith.constant 0 : index
    %c0_0 = arith.constant 0 : index
    %c0_1 = arith.constant 0 : index
    %0 = vector.load %arg1[%c0, %c0_0, %c0_1] : memref<2x16x128xf32, #tpu.memory_space<vmem>>, vector<2x16x128xf32>
    %1 = vector.shape_cast %0 : vector<2x16x128xf32> to vector<32x128xf32>
    %2 = arith.truncf %1 : vector<32x128xf32> to vector<32x128xbf16>
    %c0_2 = arith.constant 0 : index
    %c0_3 = arith.constant 0 : index
    %3 = vector.load %arg2[%c0_2, %c0_3] : memref<128x768xbf16, #tpu.memory_space<vmem>>, vector<128x768xbf16>
    %cst = arith.constant dense<0.000000e+00> : vector<32x768xf32>
    %4 = tpu.matmul %2, %3, %cst {dimension_numbers = #tpu.dot_dimension_numbers<[1], [0], [0], [1], [0, 0, 1, 1], [], []>} : vector<32x128xbf16>, vector<128x768xbf16>, vector<32x768xf32> -> vector<32x768xf32>
    %c0_4 = arith.constant 0 : index
    %c0_5 = arith.constant 0 : index
    %5 = vector.load %arg3[%c0_4, %c0_5] : memref<1x768xf32, #tpu.memory_space<vmem>>, vector<1x768xf32>
    %6 = vector.broadcast %5 : vector<1x768xf32> to vector<32x768xf32>
    %7 = arith.addf %4, %6 : vector<32x768xf32>
    %cst_6 = arith.constant 0.000000e+00 : f32
    %cst_7 = arith.constant 6.000000e+00 : f32
    %8 = vector.broadcast %cst_6 : f32 to vector<32x768xf32>
    %9 = arith.maximumf %8, %7 : vector<32x768xf32>
    %10 = vector.broadcast %cst_7 : f32 to vector<32x768xf32>
    %11 = arith.minimumf %10, %9 : vector<32x768xf32>
    %12 = arith.truncf %11 : vector<32x768xf32> to vector<32x768xbf16>
    %13 = tpu.iota {dimensions = array<i32: 0>} : vector<32x1xi32>
    %c16_i32 = arith.constant 16 : i32
    %c0_i32 = arith.constant 0 : i32
    %14 = arith.cmpi eq, %c16_i32, %c0_i32 : i32
    %c1_i32 = arith.constant 1 : i32
    %15 = arith.select %14, %c1_i32, %c16_i32 : i32
    %16 = vector.broadcast %15 : i32 to vector<32x1xi32>
    %17 = arith.remsi %13, %16 : vector<32x1xi32>
    %c0_i32_8 = arith.constant 0 : i32
    %18 = vector.broadcast %c0_i32_8 : i32 to vector<32x1xi32>
    %19 = arith.cmpi ne, %17, %18 : vector<32x1xi32>
    %c0_i32_9 = arith.constant 0 : i32
    %20 = vector.broadcast %c0_i32_9 : i32 to vector<32x1xi32>
    %21 = arith.cmpi slt, %17, %20 : vector<32x1xi32>
    %c0_i32_10 = arith.constant 0 : i32
    %22 = arith.cmpi slt, %15, %c0_i32_10 : i32
    %23 = vector.broadcast %22 : i1 to vector<32x1xi1>
    %24 = vector.broadcast %23 : vector<32x1xi1> to vector<32x1xi1>
    %25 = arith.xori %21, %24 : vector<32x1xi1>
    %26 = arith.andi %25, %19 : vector<32x1xi1>
    %27 = vector.broadcast %15 : i32 to vector<32x1xi32>
    %28 = arith.addi %17, %27 : vector<32x1xi32>
    %29 = arith.select %26, %28, %17 : vector<32x1xi1>, vector<32x1xi32>
    %c0_i32_11 = arith.constant 0 : i32
    %30 = vector.broadcast %c0_i32_11 : i32 to vector<32x1xi32>
    %31 = arith.cmpi sgt, %29, %30 : vector<32x1xi32>
    %c15_i32 = arith.constant 15 : i32
    %32 = vector.broadcast %c15_i32 : i32 to vector<32x1xi32>
    %33 = arith.cmpi slt, %29, %32 : vector<32x1xi32>
    %cst_12 = arith.constant 0.000000e+00 : bf16
    %34 = vector.broadcast %cst_12 : bf16 to vector<32x768xbf16>
    %cst_13 = arith.constant 0.000000e+00 : bf16
    %35 = vector.broadcast %cst_13 : bf16 to vector<32x48xbf16>
    %36 = vector.extract_strided_slice %12 {offsets = [0, 0], sizes = [32, 720], strides = [1, 1]} : vector<32x768xbf16> to vector<32x720xbf16>
    %37 = tpu.concatenate %35, %36 in 1 : vector<32x48xbf16>, vector<32x720xbf16> -> vector<32x768xbf16>
    %cst_14 = arith.constant 0.000000e+00 : bf16
    %38 = vector.broadcast %cst_14 : bf16 to vector<1x768xbf16>
    %39 = vector.extract_strided_slice %37 {offsets = [0, 0], sizes = [31, 768], strides = [1, 1]} : vector<32x768xbf16> to vector<31x768xbf16>
    %40 = tpu.concatenate %38, %39 in 0 : vector<1x768xbf16>, vector<31x768xbf16> -> vector<32x768xbf16>
    %cst_15 = arith.constant 0.000000e+00 : bf16
    %41 = vector.broadcast %cst_15 : bf16 to vector<32x768xbf16>
    %42 = vector.shape_cast %31 : vector<32x1xi1> to vector<32x1xi1>
    %43 = vector.broadcast %42 : vector<32x1xi1> to vector<32x768xi1>
    %44 = arith.select %43, %40, %41 : vector<32x768xi1>, vector<32x768xbf16>
    %c0_16 = arith.constant 0 : index
    %c0_17 = arith.constant 0 : index
    %45 = vector.load %arg4[%c0_16, %c0_17] : memref<9x768xbf16, #tpu.memory_space<vmem>>, vector<1x768xbf16>
    %46 = vector.shape_cast %45 : vector<1x768xbf16> to vector<768xbf16>
    %47 = vector.shape_cast %46 : vector<768xbf16> to vector<1x768xbf16>
    %48 = vector.broadcast %47 : vector<1x768xbf16> to vector<32x768xbf16>
    %49 = arith.mulf %44, %48 : vector<32x768xbf16>
    %50 = arith.addf %34, %49 : vector<32x768xbf16>
    %c3 = arith.constant 3 : index
    %c0_18 = arith.constant 0 : index
    %51 = vector.load %arg4[%c3, %c0_18] : memref<9x768xbf16, #tpu.memory_space<vmem>>, vector<1x768xbf16>
    %52 = vector.shape_cast %51 : vector<1x768xbf16> to vector<768xbf16>
    %53 = vector.shape_cast %52 : vector<768xbf16> to vector<1x768xbf16>
    %54 = vector.broadcast %53 : vector<1x768xbf16> to vector<32x768xbf16>
    %55 = arith.mulf %37, %54 : vector<32x768xbf16>
    %56 = arith.addf %50, %55 : vector<32x768xbf16>
    %57 = vector.extract_strided_slice %37 {offsets = [1, 0], sizes = [31, 768], strides = [1, 1]} : vector<32x768xbf16> to vector<31x768xbf16>
    %cst_19 = arith.constant 0.000000e+00 : bf16
    %58 = vector.broadcast %cst_19 : bf16 to vector<1x768xbf16>
    %59 = tpu.concatenate %57, %58 in 0 : vector<31x768xbf16>, vector<1x768xbf16> -> vector<32x768xbf16>
    %cst_20 = arith.constant 0.000000e+00 : bf16
    %60 = vector.broadcast %cst_20 : bf16 to vector<32x768xbf16>
    %61 = vector.shape_cast %33 : vector<32x1xi1> to vector<32x1xi1>
    %62 = vector.broadcast %61 : vector<32x1xi1> to vector<32x768xi1>
    %63 = arith.select %62, %59, %60 : vector<32x768xi1>, vector<32x768xbf16>
    %c6 = arith.constant 6 : index
    %c0_21 = arith.constant 0 : index
    %64 = vector.load %arg4[%c6, %c0_21] : memref<9x768xbf16, #tpu.memory_space<vmem>>, vector<1x768xbf16>
    %65 = vector.shape_cast %64 : vector<1x768xbf16> to vector<768xbf16>
    %66 = vector.shape_cast %65 : vector<768xbf16> to vector<1x768xbf16>
    %67 = vector.broadcast %66 : vector<1x768xbf16> to vector<32x768xbf16>
    %68 = arith.mulf %63, %67 : vector<32x768xbf16>
    %69 = arith.addf %56, %68 : vector<32x768xbf16>
    %cst_22 = arith.constant 0.000000e+00 : bf16
    %70 = vector.broadcast %cst_22 : bf16 to vector<1x768xbf16>
    %71 = vector.extract_strided_slice %12 {offsets = [0, 0], sizes = [31, 768], strides = [1, 1]} : vector<32x768xbf16> to vector<31x768xbf16>
    %72 = tpu.concatenate %70, %71 in 0 : vector<1x768xbf16>, vector<31x768xbf16> -> vector<32x768xbf16>
    %cst_23 = arith.constant 0.000000e+00 : bf16
    %73 = vector.broadcast %cst_23 : bf16 to vector<32x768xbf16>
    %74 = vector.shape_cast %31 : vector<32x1xi1> to vector<32x1xi1>
    %75 = vector.broadcast %74 : vector<32x1xi1> to vector<32x768xi1>
    %76 = arith.select %75, %72, %73 : vector<32x768xi1>, vector<32x768xbf16>
    %c1 = arith.constant 1 : index
    %c0_24 = arith.constant 0 : index
    %77 = vector.load %arg4[%c1, %c0_24] : memref<9x768xbf16, #tpu.memory_space<vmem>>, vector<1x768xbf16>
    %78 = vector.shape_cast %77 : vector<1x768xbf16> to vector<768xbf16>
    %79 = vector.shape_cast %78 : vector<768xbf16> to vector<1x768xbf16>
    %80 = vector.broadcast %79 : vector<1x768xbf16> to vector<32x768xbf16>
    %81 = arith.mulf %76, %80 : vector<32x768xbf16>
    %82 = arith.addf %69, %81 : vector<32x768xbf16>
    %c4 = arith.constant 4 : index
    %c0_25 = arith.constant 0 : index
    %83 = vector.load %arg4[%c4, %c0_25] : memref<9x768xbf16, #tpu.memory_space<vmem>>, vector<1x768xbf16>
    %84 = vector.shape_cast %83 : vector<1x768xbf16> to vector<768xbf16>
    %85 = vector.shape_cast %84 : vector<768xbf16> to vector<1x768xbf16>
    %86 = vector.broadcast %85 : vector<1x768xbf16> to vector<32x768xbf16>
    %87 = arith.mulf %12, %86 : vector<32x768xbf16>
    %88 = arith.addf %82, %87 : vector<32x768xbf16>
    %89 = vector.extract_strided_slice %12 {offsets = [1, 0], sizes = [31, 768], strides = [1, 1]} : vector<32x768xbf16> to vector<31x768xbf16>
    %cst_26 = arith.constant 0.000000e+00 : bf16
    %90 = vector.broadcast %cst_26 : bf16 to vector<1x768xbf16>
    %91 = tpu.concatenate %89, %90 in 0 : vector<31x768xbf16>, vector<1x768xbf16> -> vector<32x768xbf16>
    %cst_27 = arith.constant 0.000000e+00 : bf16
    %92 = vector.broadcast %cst_27 : bf16 to vector<32x768xbf16>
    %93 = vector.shape_cast %33 : vector<32x1xi1> to vector<32x1xi1>
    %94 = vector.broadcast %93 : vector<32x1xi1> to vector<32x768xi1>
    %95 = arith.select %94, %91, %92 : vector<32x768xi1>, vector<32x768xbf16>
    %c7 = arith.constant 7 : index
    %c0_28 = arith.constant 0 : index
    %96 = vector.load %arg4[%c7, %c0_28] : memref<9x768xbf16, #tpu.memory_space<vmem>>, vector<1x768xbf16>
    %97 = vector.shape_cast %96 : vector<1x768xbf16> to vector<768xbf16>
    %98 = vector.shape_cast %97 : vector<768xbf16> to vector<1x768xbf16>
    %99 = vector.broadcast %98 : vector<1x768xbf16> to vector<32x768xbf16>
    %100 = arith.mulf %95, %99 : vector<32x768xbf16>
    %101 = arith.addf %88, %100 : vector<32x768xbf16>
    %102 = vector.extract_strided_slice %12 {offsets = [0, 48], sizes = [32, 720], strides = [1, 1]} : vector<32x768xbf16> to vector<32x720xbf16>
    %cst_29 = arith.constant 0.000000e+00 : bf16
    %103 = vector.broadcast %cst_29 : bf16 to vector<32x48xbf16>
    %104 = tpu.concatenate %102, %103 in 1 : vector<32x720xbf16>, vector<32x48xbf16> -> vector<32x768xbf16>
    %cst_30 = arith.constant 0.000000e+00 : bf16
    %105 = vector.broadcast %cst_30 : bf16 to vector<1x768xbf16>
    %106 = vector.extract_strided_slice %104 {offsets = [0, 0], sizes = [31, 768], strides = [1, 1]} : vector<32x768xbf16> to vector<31x768xbf16>
    %107 = tpu.concatenate %105, %106 in 0 : vector<1x768xbf16>, vector<31x768xbf16> -> vector<32x768xbf16>
    %cst_31 = arith.constant 0.000000e+00 : bf16
    %108 = vector.broadcast %cst_31 : bf16 to vector<32x768xbf16>
    %109 = vector.shape_cast %31 : vector<32x1xi1> to vector<32x1xi1>
    %110 = vector.broadcast %109 : vector<32x1xi1> to vector<32x768xi1>
    %111 = arith.select %110, %107, %108 : vector<32x768xi1>, vector<32x768xbf16>
    %c2 = arith.constant 2 : index
    %c0_32 = arith.constant 0 : index
    %112 = vector.load %arg4[%c2, %c0_32] : memref<9x768xbf16, #tpu.memory_space<vmem>>, vector<1x768xbf16>
    %113 = vector.shape_cast %112 : vector<1x768xbf16> to vector<768xbf16>
    %114 = vector.shape_cast %113 : vector<768xbf16> to vector<1x768xbf16>
    %115 = vector.broadcast %114 : vector<1x768xbf16> to vector<32x768xbf16>
    %116 = arith.mulf %111, %115 : vector<32x768xbf16>
    %117 = arith.addf %101, %116 : vector<32x768xbf16>
    %c5 = arith.constant 5 : index
    %c0_33 = arith.constant 0 : index
    %118 = vector.load %arg4[%c5, %c0_33] : memref<9x768xbf16, #tpu.memory_space<vmem>>, vector<1x768xbf16>
    %119 = vector.shape_cast %118 : vector<1x768xbf16> to vector<768xbf16>
    %120 = vector.shape_cast %119 : vector<768xbf16> to vector<1x768xbf16>
    %121 = vector.broadcast %120 : vector<1x768xbf16> to vector<32x768xbf16>
    %122 = arith.mulf %104, %121 : vector<32x768xbf16>
    %123 = arith.addf %117, %122 : vector<32x768xbf16>
    %124 = vector.extract_strided_slice %104 {offsets = [1, 0], sizes = [31, 768], strides = [1, 1]} : vector<32x768xbf16> to vector<31x768xbf16>
    %cst_34 = arith.constant 0.000000e+00 : bf16
    %125 = vector.broadcast %cst_34 : bf16 to vector<1x768xbf16>
    %126 = tpu.concatenate %124, %125 in 0 : vector<31x768xbf16>, vector<1x768xbf16> -> vector<32x768xbf16>
    %cst_35 = arith.constant 0.000000e+00 : bf16
    %127 = vector.broadcast %cst_35 : bf16 to vector<32x768xbf16>
    %128 = vector.shape_cast %33 : vector<32x1xi1> to vector<32x1xi1>
    %129 = vector.broadcast %128 : vector<32x1xi1> to vector<32x768xi1>
    %130 = arith.select %129, %126, %127 : vector<32x768xi1>, vector<32x768xbf16>
    %c8 = arith.constant 8 : index
    %c0_36 = arith.constant 0 : index
    %131 = vector.load %arg4[%c8, %c0_36] : memref<9x768xbf16, #tpu.memory_space<vmem>>, vector<1x768xbf16>
    %132 = vector.shape_cast %131 : vector<1x768xbf16> to vector<768xbf16>
    %133 = vector.shape_cast %132 : vector<768xbf16> to vector<1x768xbf16>
    %134 = vector.broadcast %133 : vector<1x768xbf16> to vector<32x768xbf16>
    %135 = arith.mulf %130, %134 : vector<32x768xbf16>
    %136 = arith.addf %123, %135 : vector<32x768xbf16>
    %137 = arith.extf %136 : vector<32x768xbf16> to vector<32x768xf32>
    %c0_37 = arith.constant 0 : index
    %c0_38 = arith.constant 0 : index
    %138 = vector.load %arg5[%c0_37, %c0_38] : memref<1x768xf32, #tpu.memory_space<vmem>>, vector<1x768xf32>
    %139 = vector.broadcast %138 : vector<1x768xf32> to vector<32x768xf32>
    %140 = arith.addf %137, %139 : vector<32x768xf32>
    %cst_39 = arith.constant 0.000000e+00 : f32
    %cst_40 = arith.constant 6.000000e+00 : f32
    %141 = vector.broadcast %cst_39 : f32 to vector<32x768xf32>
    %142 = arith.maximumf %141, %140 : vector<32x768xf32>
    %143 = vector.broadcast %cst_40 : f32 to vector<32x768xf32>
    %144 = arith.minimumf %143, %142 : vector<32x768xf32>
    %145 = arith.truncf %144 : vector<32x768xf32> to vector<32x768xbf16>
    %c0_41 = arith.constant 0 : index
    %c0_42 = arith.constant 0 : index
    %146 = vector.load %arg6[%c0_41, %c0_42] : memref<768x128xbf16, #tpu.memory_space<vmem>>, vector<768x128xbf16>
    %cst_43 = arith.constant dense<0.000000e+00> : vector<32x128xf32>
    %147 = tpu.matmul %145, %146, %cst_43 {dimension_numbers = #tpu.dot_dimension_numbers<[1], [0], [0], [1], [0, 0, 1, 1], [], []>} : vector<32x768xbf16>, vector<768x128xbf16>, vector<32x128xf32> -> vector<32x128xf32>
    %c0_44 = arith.constant 0 : index
    %c0_45 = arith.constant 0 : index
    %148 = vector.load %arg7[%c0_44, %c0_45] : memref<1x128xf32, #tpu.memory_space<vmem>>, vector<1x128xf32>
    %149 = vector.broadcast %148 : vector<1x128xf32> to vector<32x128xf32>
    %150 = arith.addf %147, %149 : vector<32x128xf32>
    %151 = arith.addf %150, %1 : vector<32x128xf32>
    %152 = vector.shape_cast %151 : vector<32x128xf32> to vector<2x16x128xf32>
    %c0_46 = arith.constant 0 : index
    %c0_47 = arith.constant 0 : index
    %c0_48 = arith.constant 0 : index
    %153 = vector.load %arg8[%c0_46, %c0_47, %c0_48] : memref<2x16x128xf32, #tpu.memory_space<vmem>>, vector<2x16x128xf32>
    tpu.vector_store %arg8[%c0_46, %c0_47, %c0_48], %152 {strides = array<i32>} : memref<2x16x128xf32, #tpu.memory_space<vmem>>, vector<2x16x128xf32>,
    return
  }
  func.func @transform_0(%arg0: i32) -> (i32, i32, i32) {
    %c0_i32 = arith.constant 0 : i32
    %c0_i32_0 = arith.constant 0 : i32
    %c0_i32_1 = arith.constant 0 : i32
    return %arg0, %c0_i32, %c0_i32_0 : i32, i32, i32
  }
  func.func @transform_1(%arg0: i32) -> (i32, i32) {
    %c0_i32 = arith.constant 0 : i32
    %c0_i32_0 = arith.constant 0 : i32
    %c0_i32_1 = arith.constant 0 : i32
    return %c0_i32, %c0_i32_0 : i32, i32
  }
  func.func @transform_2(%arg0: i32) -> (i32, i32) {
    %c0_i32 = arith.constant 0 : i32
    %c0_i32_0 = arith.constant 0 : i32
    %c0_i32_1 = arith.constant 0 : i32
    return %c0_i32, %c0_i32_0 : i32, i32
  }
  func.func @transform_3(%arg0: i32) -> (i32, i32) {
    %c0_i32 = arith.constant 0 : i32
    %c0_i32_0 = arith.constant 0 : i32
    %c0_i32_1 = arith.constant 0 : i32
    return %c0_i32, %c0_i32_0 : i32, i32
  }
  func.func @transform_4(%arg0: i32) -> (i32, i32) {
    %c0_i32 = arith.constant 0 : i32
    %c0_i32_0 = arith.constant 0 : i32
    %c0_i32_1 = arith.constant 0 : i32
    return %c0_i32, %c0_i32_0 : i32, i32
  }
  func.func @transform_5(%arg0: i32) -> (i32, i32) {
    %c0_i32 = arith.constant 0 : i32
    %c0_i32_0 = arith.constant 0 : i32
    %c0_i32_1 = arith.constant 0 : i32
    return %c0_i32, %c0_i32_0 : i32, i32
  }
  func.func @transform_6(%arg0: i32) -> (i32, i32) {
    %c0_i32 = arith.constant 0 : i32
    %c0_i32_0 = arith.constant 0 : i32
    %c0_i32_1 = arith.constant 0 : i32
    return %c0_i32, %c0_i32_0 : i32, i32
  }
  func.func @transform_7(%arg0: i32) -> (i32, i32, i32) {
    %c0_i32 = arith.constant 0 : i32
    %c0_i32_0 = arith.constant 0 : i32
    %c0_i32_1 = arith.constant 0 : i32
    return %arg0, %c0_i32, %c0_i32_0 : i32, i32, i32
  }
}

</mosaic_0001>

<llo_original>
// kernel: inverted_residual_forward.1
$region0: #{inverted_residual_forward.1}
  #allocation0 [shape = 'u32[]', space=smem, size = 0x4, offset = 0x4, fixed_abs, tag = 'smem constant byte address 0x4 - core index']
  #allocation1 [shape = 'u32[144,128]{1,0:T(1,128)}', space=vmem, size = 0x12000, scoped, tag = 'internal scratch']
  %s0 = inlined_call_operand.vmem [shape: f32[2,16,128], index: 0, kind: input, shape index: {}]
  %s1 = inlined_call_operand.vmem [shape: bf16[128,768], index: 1, kind: input, shape index: {}]
  %s2 = inlined_call_operand.vmem [shape: f32[1,768], index: 2, kind: input, shape index: {}]
  %s3 = inlined_call_operand.hbm [shape: bf16[9,768], index: 3, kind: input, shape index: {}]
  %s4 = inlined_call_operand.vmem [shape: f32[1,768], index: 4, kind: input, shape index: {}]
  %s5 = inlined_call_operand.vmem [shape: bf16[768,128], index: 5, kind: input, shape index: {}]
  %s6 = inlined_call_operand.vmem [shape: f32[1,128], index: 6, kind: input, shape index: {}]
  %s7 = inlined_call_operand.vmem [shape: f32[2,16,128], index: 7, kind: output, shape index: {}]
  %s8 = sld [smem:[#allocation0]]
  $region42: #{inverted_residual_forward.1} parent=0
    _
  %s10 = ssub.s32 1, %s8
  %s11 = scalar_select 0, %s10, %s8
  $region1: #{inverted_residual_forward.1} parent=0
    #allocation2 [shape = 'u8[24576]{0}', space=vmem, size = 0x6000, scoped, tag = 'input window, operand 3, single buffered']
    #allocation3 [shape = 's32[1]{0}', space=sflag, size = 0x4, scoped, tag = 'scoped memory for inverted_residual_forward.1']
    %12 = vsyncpa [#allocation3], 0
    // Predicated region
    $region2: #{inverted_residual_forward.1} parent=1 // pred_check
      _
    $region3: #{inverted_residual_forward.1} parent=1 // pred_check_branch
      %14 = sbr.rel (0) target = $region5
    $region4: #{inverted_residual_forward.1} parent=1 // pred_region
      _
    $region5: #{inverted_residual_forward.1} parent=1 // pred_fallthru
      _
    // Predicated region
    $region6: #{inverted_residual_forward.1} parent=1 // pred_check
      _
    $region7: #{inverted_residual_forward.1} parent=1 // pred_check_branch
      %16 = sbr.rel (0) target = $region9
    $region8: #{inverted_residual_forward.1} parent=1 // pred_region
      _
    $region9: #{inverted_residual_forward.1} parent=1 // pred_fallthru
      _
    // Predicated region
    $region10: #{inverted_residual_forward.1} parent=1 // pred_check
      _
    $region11: #{inverted_residual_forward.1} parent=1 // pred_check_branch
      %18 = sbr.rel (0) target = $region13
    $region12: #{inverted_residual_forward.1} parent=1 // pred_region
      _
    $region13: #{inverted_residual_forward.1} parent=1 // pred_fallthru
      _
    // Predicated region
    $region14: #{inverted_residual_forward.1} parent=1 // pred_check
      _
    $region15: #{inverted_residual_forward.1} parent=1 // pred_check_branch
      %20 = sbr.rel (0) target = $region17
    $region16: #{inverted_residual_forward.1} parent=1 // pred_region
      %s22 = ssub.s32 768, 768
      %23 = vsyncadd [#allocation3], %s22
      %s24 = sshll.u32 [#allocation2], 4
      %s25 = int_to_ptr.vmem [resolvable:$true] %s24
      %30 = dma.hbm_to_vmem [thread:$0]  %s3, 768, %s25, [#allocation3], 384, 384, 24
    $region17: #{inverted_residual_forward.1} parent=1 // pred_fallthru
      _
    // Predicated region
    $region18: #{inverted_residual_forward.1} parent=1 // pred_check
      _
    $region19: #{inverted_residual_forward.1} parent=1 // pred_check_branch
      %32 = sbr.rel (0) target = $region21
    $region20: #{inverted_residual_forward.1} parent=1 // pred_region
      _
    $region21: #{inverted_residual_forward.1} parent=1 // pred_fallthru
      _
    // Predicated region
    $region22: #{inverted_residual_forward.1} parent=1 // pred_check
      _
    $region23: #{inverted_residual_forward.1} parent=1 // pred_check_branch
      %34 = sbr.rel (0) target = $region25
    $region24: #{inverted_residual_forward.1} parent=1 // pred_region
      _
    $region25: #{inverted_residual_forward.1} parent=1 // pred_fallthru
      _
    // Predicated region
    $region26: #{inverted_residual_forward.1} parent=1 // pred_check
      _
    $region27: #{inverted_residual_forward.1} parent=1 // pred_check_branch
      %36 = sbr.rel (0) target = $region29
    $region28: #{inverted_residual_forward.1} parent=1 // pred_region
      _
    $region29: #{inverted_residual_forward.1} parent=1 // pred_fallthru
      _
    // Predicated region
    $region30: #{inverted_residual_forward.1} parent=1 // pred_check
      _
    $region31: #{inverted_residual_forward.1} parent=1 // pred_check_branch
      %38 = sbr.rel (0) target = $region33
    $region32: #{inverted_residual_forward.1} parent=1 // pred_region
      %39 = dma.done [#allocation3], 768
    $region33: #{inverted_residual_forward.1} parent=1 // pred_fallthru
      _
    %v43 = vld [vmem:[%s0] sm:$0xff]
    %v44 = vld [vmem:[%s0 + $0x8] sm:$0xff]
    %v45 = vld [vmem:[%s0 + $0x10] sm:$0xff]
    %v46 = vld [vmem:[%s0 + $0x18] sm:$0xff]
    %v47 = vpack.c.bf16 %v44, %v43
    %v48 = vpack.c.bf16 %v46, %v45
    %v49 = vld [vmem:[%s1] sm:$0xff]
    %v50 = vld [vmem:[%s1 + $0x8] sm:$0xff]
    %v51 = vld [vmem:[%s1 + $0x10] sm:$0xff]
    %v52 = vld [vmem:[%s1 + $0x18] sm:$0xff]
    %v53 = vld [vmem:[%s1 + $0x20] sm:$0xff]
    %v54 = vld [vmem:[%s1 + $0x28] sm:$0xff]
    %v55 = vld [vmem:[%s1 + $0x30] sm:$0xff]
    %v56 = vld [vmem:[%s1 + $0x38] sm:$0xff]
    %v57 = vld [vmem:[%s1 + $0x40] sm:$0xff]
    %v58 = vld [vmem:[%s1 + $0x48] sm:$0xff]
    %v59 = vld [vmem:[%s1 + $0x50] sm:$0xff]
    %v60 = vld [vmem:[%s1 + $0x58] sm:$0xff]
    %v61 = vld [vmem:[%s1 + $0x60] sm:$0xff]
    %v62 = vld [vmem:[%s1 + $0x68] sm:$0xff]
    %v63 = vld [vmem:[%s1 + $0x70] sm:$0xff]
    %v64 = vld [vmem:[%s1 + $0x78] sm:$0xff]
    %v65 = vld [vmem:[%s1 + $0x80] sm:$0xff]
    %v66 = vld [vmem:[%s1 + $0x88] sm:$0xff]
    %v67 = vld [vmem:[%s1 + $0x90] sm:$0xff]
    %v68 = vld [vmem:[%s1 + $0x98] sm:$0xff]
    %v69 = vld [vmem:[%s1 + $0xa0] sm:$0xff]
    %v70 = vld [vmem:[%s1 + $0xa8] sm:$0xff]
    %v71 = vld [vmem:[%s1 + $0xb0] sm:$0xff]
    %v72 = vld [vmem:[%s1 + $0xb8] sm:$0xff]
    %v73 = vld [vmem:[%s1 + $0xc0] sm:$0xff]
    %v74 = vld [vmem:[%s1 + $0xc8] sm:$0xff]
    %v75 = vld [vmem:[%s1 + $0xd0] sm:$0xff]
    %v76 = vld [vmem:[%s1 + $0xd8] sm:$0xff]
    %v77 = vld [vmem:[%s1 + $0xe0] sm:$0xff]
    %v78 = vld [vmem:[%s1 + $0xe8] sm:$0xff]
    %v79 = vld [vmem:[%s1 + $0xf0] sm:$0xff]
    %v80 = vld [vmem:[%s1 + $0xf8] sm:$0xff]
    %v81 = vld [vmem:[%s1 + $0x100] sm:$0xff]
    %v82 = vld [vmem:[%s1 + $0x108] sm:$0xff]
    %v83 = vld [vmem:[%s1 + $0x110] sm:$0xff]
    %v84 = vld [vmem:[%s1 + $0x118] sm:$0xff]
    %v85 = vld [vmem:[%s1 + $0x120] sm:$0xff]
    %v86 = vld [vmem:[%s1 + $0x128] sm:$0xff]
    %v87 = vld [vmem:[%s1 + $0x130] sm:$0xff]
    %v88 = vld [vmem:[%s1 + $0x138] sm:$0xff]
    %v89 = vld [vmem:[%s1 + $0x140] sm:$0xff]
    %v90 = vld [vmem:[%s1 + $0x148] sm:$0xff]
    %v91 = vld [vmem:[%s1 + $0x150] sm:$0xff]
    %v92 = vld [vmem:[%s1 + $0x158] sm:$0xff]
    %v93 = vld [vmem:[%s1 + $0x160] sm:$0xff]
    %v94 = vld [vmem:[%s1 + $0x168] sm:$0xff]
    %v95 = vld [vmem:[%s1 + $0x170] sm:$0xff]
    %v96 = vld [vmem:[%s1 + $0x178] sm:$0xff]
    %v97 = vld [vmem:[%s2] sm:$0x3f]
    %v99 = vlaneseq
    %v100 = vshrl.u32 %v99, 7
    %v101 = vsub.s32 0, %v100
    %v102 = vrot.slane %v97, %v101
    %v103 = vlaneseq
    %v104 = vshrl.u32 %v103, 7
    %v105 = vsub.s32 1, %v104
    %v106 = vrot.slane %v97, %v105
    %v107 = vlaneseq
    %v108 = vshrl.u32 %v107, 7
    %v109 = vsub.s32 2, %v108
    %v110 = vrot.slane %v97, %v109
    %v111 = vlaneseq
    %v112 = vshrl.u32 %v111, 7
    %v113 = vsub.s32 3, %v112
    %v114 = vrot.slane %v97, %v113
    %v115 = vlaneseq
    %v116 = vshrl.u32 %v115, 7
    %v117 = vsub.s32 4, %v116
    %v118 = vrot.slane %v97, %v117
    %v119 = vlaneseq
    %v120 = vshrl.u32 %v119, 7
    %v121 = vsub.s32 5, %v120
    %v122 = vrot.slane %v97, %v121
    %v177 = vunpack.c.l.b16 %v49
    %v178 = vunpack.c.h.b16 %v49
    %v179 = vunpack.c.l.b16 %v50
    %v180 = vunpack.c.h.b16 %v50
    %v181 = vunpack.c.l.b16 %v51
    %v182 = vunpack.c.h.b16 %v51
    %v183 = vunpack.c.l.b16 %v52
    %v184 = vunpack.c.h.b16 %v52
    %v185 = vunpack.c.l.b16 %v53
    %v186 = vunpack.c.h.b16 %v53
    %v187 = vunpack.c.l.b16 %v54
    %v188 = vunpack.c.h.b16 %v54
    %v189 = vunpack.c.l.b16 %v55
    %v190 = vunpack.c.h.b16 %v55
    %v191 = vunpack.c.l.b16 %v56
    %v192 = vunpack.c.h.b16 %v56
    %v193 = vunpack.c.l.b16 %v57
    %v194 = vunpack.c.h.b16 %v57
    %v195 = vunpack.c.l.b16 %v58
    %v196 = vunpack.c.h.b16 %v58
    %v197 = vunpack.c.l.b16 %v59
    %v198 = vunpack.c.h.b16 %v59
    %v199 = vunpack.c.l.b16 %v60
    %v200 = vunpack.c.h.b16 %v60
    %v201 = vunpack.c.l.b16 %v61
    %v202 = vunpack.c.h.b16 %v61
    %v203 = vunpack.c.l.b16 %v62
    %v204 = vunpack.c.h.b16 %v62
    %v205 = vunpack.c.l.b16 %v63
    %v206 = vunpack.c.h.b16 %v63
    %v207 = vunpack.c.l.b16 %v64
    %v208 = vunpack.c.h.b16 %v64
    %v209 = vunpack.c.l.b16 %v65
    %v210 = vunpack.c.h.b16 %v65
    %v211 = vunpack.c.l.b16 %v66
    %v212 = vunpack.c.h.b16 %v66
    %v213 = vunpack.c.l.b16 %v67
    %v214 = vunpack.c.h.b16 %v67
    %v215 = vunpack.c.l.b16 %v68
    %v216 = vunpack.c.h.b16 %v68
    %v217 = vunpack.c.l.b16 %v69
    %v218 = vunpack.c.h.b16 %v69
    %v219 = vunpack.c.l.b16 %v70
    %v220 = vunpack.c.h.b16 %v70
    %v221 = vunpack.c.l.b16 %v71
    %v222 = vunpack.c.h.b16 %v71
    %v223 = vunpack.c.l.b16 %v72
    %v224 = vunpack.c.h.b16 %v72
    %v225 = vunpack.c.l.b16 %v73
    %v226 = vunpack.c.h.b16 %v73
    %v227 = vunpack.c.l.b16 %v74
    %v228 = vunpack.c.h.b16 %v74
    %v229 = vunpack.c.l.b16 %v75
    %v230 = vunpack.c.h.b16 %v75
    %v231 = vunpack.c.l.b16 %v76
    %v232 = vunpack.c.h.b16 %v76
    %v233 = vunpack.c.l.b16 %v77
    %v234 = vunpack.c.h.b16 %v77
    %v235 = vunpack.c.l.b16 %v78
    %v236 = vunpack.c.h.b16 %v78
    %v237 = vunpack.c.l.b16 %v79
    %v238 = vunpack.c.h.b16 %v79
    %v239 = vunpack.c.l.b16 %v80
    %v240 = vunpack.c.h.b16 %v80
    %v241 = vunpack.c.l.b16 %v81
    %v242 = vunpack.c.h.b16 %v81
    %v243 = vunpack.c.l.b16 %v82
    %v244 = vunpack.c.h.b16 %v82
    %v245 = vunpack.c.l.b16 %v83
    %v246 = vunpack.c.h.b16 %v83
    %v247 = vunpack.c.l.b16 %v84
    %v248 = vunpack.c.h.b16 %v84
    %v249 = vunpack.c.l.b16 %v85
    %v250 = vunpack.c.h.b16 %v85
    %v251 = vunpack.c.l.b16 %v86
    %v252 = vunpack.c.h.b16 %v86
    %v253 = vunpack.c.l.b16 %v87
    %v254 = vunpack.c.h.b16 %v87
    %v255 = vunpack.c.l.b16 %v88
    %v256 = vunpack.c.h.b16 %v88
    %v257 = vunpack.c.l.b16 %v89
    %v258 = vunpack.c.h.b16 %v89
    %v259 = vunpack.c.l.b16 %v90
    %v260 = vunpack.c.h.b16 %v90
    %v261 = vunpack.c.l.b16 %v91
    %v262 = vunpack.c.h.b16 %v91
    %v263 = vunpack.c.l.b16 %v92
    %v264 = vunpack.c.h.b16 %v92
    %v265 = vunpack.c.l.b16 %v93
    %v266 = vunpack.c.h.b16 %v93
    %v267 = vunpack.c.l.b16 %v94
    %v268 = vunpack.c.h.b16 %v94
    %v269 = vunpack.c.l.b16 %v95
    %v270 = vunpack.c.h.b16 %v95
    %v271 = vunpack.c.l.b16 %v96
    %v272 = vunpack.c.h.b16 %v96
    %v273 = vpack.c.b16 %v183, %v177
    %v274 = vpack.c.b16 %v184, %v178
    %v275 = vpack.c.b16 %v185, %v179
    %v276 = vpack.c.b16 %v186, %v180
    %v277 = vpack.c.b16 %v187, %v181
    %v278 = vpack.c.b16 %v188, %v182
    %v279 = vpack.c.b16 %v195, %v189
    %v280 = vpack.c.b16 %v196, %v190
    %v281 = vpack.c.b16 %v197, %v191
    %v282 = vpack.c.b16 %v198, %v192
    %v283 = vpack.c.b16 %v199, %v193
    %v284 = vpack.c.b16 %v200, %v194
    %v285 = vpack.c.b16 %v207, %v201
    %v286 = vpack.c.b16 %v208, %v202
    %v287 = vpack.c.b16 %v209, %v203
    %v288 = vpack.c.b16 %v210, %v204
    %v289 = vpack.c.b16 %v211, %v205
    %v290 = vpack.c.b16 %v212, %v206
    %v291 = vpack.c.b16 %v219, %v213
    %v292 = vpack.c.b16 %v220, %v214
    %v293 = vpack.c.b16 %v221, %v215
    %v294 = vpack.c.b16 %v222, %v216
    %v295 = vpack.c.b16 %v223, %v217
    %v296 = vpack.c.b16 %v224, %v218
    %v297 = vpack.c.b16 %v231, %v225
    %v298 = vpack.c.b16 %v232, %v226
    %v299 = vpack.c.b16 %v233, %v227
    %v300 = vpack.c.b16 %v234, %v228
    %v301 = vpack.c.b16 %v235, %v229
    %v302 = vpack.c.b16 %v236, %v230
    %v303 = vpack.c.b16 %v243, %v237
    %v304 = vpack.c.b16 %v244, %v238
    %v305 = vpack.c.b16 %v245, %v239
    %v306 = vpack.c.b16 %v246, %v240
    %v307 = vpack.c.b16 %v247, %v241
    %v308 = vpack.c.b16 %v248, %v242
    %v309 = vpack.c.b16 %v255, %v249
    %v310 = vpack.c.b16 %v256, %v250
    %v311 = vpack.c.b16 %v257, %v251
    %v312 = vpack.c.b16 %v258, %v252
    %v313 = vpack.c.b16 %v259, %v253
    %v314 = vpack.c.b16 %v260, %v254
    %v315 = vpack.c.b16 %v267, %v261
    %v316 = vpack.c.b16 %v268, %v262
    %v317 = vpack.c.b16 %v269, %v263
    %v318 = vpack.c.b16 %v270, %v264
    %v319 = vpack.c.b16 %v271, %v265
    %v320 = vpack.c.b16 %v272, %v266
    %369 = vmatprep.subr.bf16.mxu0 %v274
    %370 = vmatpush1.bf16.msra.mxu0 %v273
    %371 = vmatprep.subr.bf16.mxu0 %v280
    %372 = vmatpush1.bf16.msra.mxu0 %v279
    %373 = vmatprep.subr.bf16.mxu0 %v286
    %374 = vmatpush1.bf16.msra.mxu0 %v285
    %375 = vmatprep.subr.bf16.mxu0 %v292
    %376 = vmatpush1.bf16.msra.mxu0 %v291
    %377 = vmatprep.subr.bf16.mxu0 %v298
    %378 = vmatpush1.bf16.msra.mxu0 %v297
    %379 = vmatprep.subr.bf16.mxu0 %v304
    %380 = vmatpush1.bf16.msra.mxu0 %v303
    %381 = vmatprep.subr.bf16.mxu0 %v310
    %382 = vmatpush1.bf16.msra.mxu0 %v309
    %383 = vmatprep.subr.bf16.mxu0 %v316
    %384 = vmatpush1.bf16.msra.mxu0 %v315
    %385 = vmatprep.subr.bf16.mxu0 0
    %386 = vmatpush1.bf16.msra.mxu0 0
    %387 = vmatprep.subr.bf16.mxu0 0
    %388 = vmatpush1.bf16.msra.mxu0 0
    %389 = vmatprep.subr.bf16.mxu0 0
    %390 = vmatpush1.bf16.msra.mxu0 0
    %391 = vmatprep.subr.bf16.mxu0 0
    %392 = vmatpush1.bf16.msra.mxu0 0
    %393 = vmatprep.subr.bf16.mxu0 0
    %394 = vmatpush1.bf16.msra.mxu0 0
    %395 = vmatprep.subr.bf16.mxu0 0
    %396 = vmatpush1.bf16.msra.mxu0 0
    %397 = vmatprep.subr.bf16.mxu0 0
    %398 = vmatpush1.bf16.msra.mxu0 0
    %399 = vmatprep.subr.bf16.mxu0 0
    %400 = vmatpush1.bf16.msra.mxu0 0
    %401 = vmatprep.mubr.bf16.mxu0 0
    %402 = vmatmul.mubr.bf16.gmra.mrb[0].mxu0 %v47
    %v403 = vpop.f32.mrb[0].mxu0
    %v404 = vadd.f32 %v102, %v403
    %v405 = vpop.f32.mrb[0].mxu0
    %v406 = vadd.f32 %v106, %v405
    %v407 = vpop.f32.mrb[0].mxu0
    %v408 = vadd.f32 %v102, %v407
    %v409 = vpop.f32.mrb[0].mxu0
    %v410 = vadd.f32 %v106, %v409
    %411 = vmatprep.mubr.bf16.mxu0 0
    %412 = vmatmul.mubr.bf16.gmra.mrb[0].mxu0 %v48
    %v413 = vpop.f32.mrb[0].mxu0
    %v414 = vadd.f32 %v102, %v413
    %v415 = vpop.f32.mrb[0].mxu0
    %v416 = vadd.f32 %v106, %v415
    %v417 = vpop.f32.mrb[0].mxu0
    %v418 = vadd.f32 %v102, %v417
    %v419 = vpop.f32.mrb[0].mxu0
    %v420 = vadd.f32 %v106, %v419
    %421 = vdwg.mxu0
    %422 = vmatprep.subr.bf16.mxu0 %v276
    %423 = vmatpush1.bf16.msra.mxu0 %v275
    %424 = vmatprep.subr.bf16.mxu0 %v282
    %425 = vmatpush1.bf16.msra.mxu0 %v281
    %426 = vmatprep.subr.bf16.mxu0 %v288
    %427 = vmatpush1.bf16.msra.mxu0 %v287
    %428 = vmatprep.subr.bf16.mxu0 %v294
    %429 = vmatpush1.bf16.msra.mxu0 %v293
    %430 = vmatprep.subr.bf16.mxu0 %v300
    %431 = vmatpush1.bf16.msra.mxu0 %v299
    %432 = vmatprep.subr.bf16.mxu0 %v306
    %433 = vmatpush1.bf16.msra.mxu0 %v305
    %434 = vmatprep.subr.bf16.mxu0 %v312
    %435 = vmatpush1.bf16.msra.mxu0 %v311
    %436 = vmatprep.subr.bf16.mxu0 %v318
    %437 = vmatpush1.bf16.msra.mxu0 %v317
    %438 = vmatprep.subr.bf16.mxu0 0
    %439 = vmatpush1.bf16.msra.mxu0 0
    %440 = vmatprep.subr.bf16.mxu0 0
    %441 = vmatpush1.bf16.msra.mxu0 0
    %442 = vmatprep.subr.bf16.mxu0 0
    %443 = vmatpush1.bf16.msra.mxu0 0
    %444 = vmatprep.subr.bf16.mxu0 0
    %445 = vmatpush1.bf16.msra.mxu0 0
    %446 = vmatprep.subr.bf16.mxu0 0
    %447 = vmatpush1.bf16.msra.mxu0 0
    %448 = vmatprep.subr.bf16.mxu0 0
    %449 = vmatpush1.bf16.msra.mxu0 0
    %450 = vmatprep.subr.bf16.mxu0 0
    %451 = vmatpush1.bf16.msra.mxu0 0
    %452 = vmatprep.subr.bf16.mxu0 0
    %453 = vmatpush1.bf16.msra.mxu0 0
    %454 = vmatprep.mubr.bf16.mxu0 0
    %455 = vmatmul.mubr.bf16.gmra.mrb[0].mxu0 %v47
    %v456 = vpop.f32.mrb[0].mxu0
    %v457 = vadd.f32 %v110, %v456
    %v458 = vpop.f32.mrb[0].mxu0
    %v459 = vadd.f32 %v114, %v458
    %v460 = vpop.f32.mrb[0].mxu0
    %v461 = vadd.f32 %v110, %v460
    %v462 = vpop.f32.mrb[0].mxu0
    %v463 = vadd.f32 %v114, %v462
    %464 = vmatprep.mubr.bf16.mxu0 0
    %465 = vmatmul.mubr.bf16.gmra.mrb[0].mxu0 %v48
    %v466 = vpop.f32.mrb[0].mxu0
    %v467 = vadd.f32 %v110, %v466
    %v468 = vpop.f32.mrb[0].mxu0
    %v469 = vadd.f32 %v114, %v468
    %v470 = vpop.f32.mrb[0].mxu0
    %v471 = vadd.f32 %v110, %v470
    %v472 = vpop.f32.mrb[0].mxu0
    %v473 = vadd.f32 %v114, %v472
    %474 = vdwg.mxu0
    %475 = vmatprep.subr.bf16.mxu0 %v278
    %476 = vmatpush1.bf16.msra.mxu0 %v277
    %477 = vmatprep.subr.bf16.mxu0 %v284
    %478 = vmatpush1.bf16.msra.mxu0 %v283
    %479 = vmatprep.subr.bf16.mxu0 %v290
    %480 = vmatpush1.bf16.msra.mxu0 %v289
    %481 = vmatprep.subr.bf16.mxu0 %v296
    %482 = vmatpush1.bf16.msra.mxu0 %v295
    %483 = vmatprep.subr.bf16.mxu0 %v302
    %484 = vmatpush1.bf16.msra.mxu0 %v301
    %485 = vmatprep.subr.bf16.mxu0 %v308
    %486 = vmatpush1.bf16.msra.mxu0 %v307
    %487 = vmatprep.subr.bf16.mxu0 %v314
    %488 = vmatpush1.bf16.msra.mxu0 %v313
    %489 = vmatprep.subr.bf16.mxu0 %v320
    %490 = vmatpush1.bf16.msra.mxu0 %v319
    %491 = vmatprep.subr.bf16.mxu0 0
    %492 = vmatpush1.bf16.msra.mxu0 0
    %493 = vmatprep.subr.bf16.mxu0 0
    %494 = vmatpush1.bf16.msra.mxu0 0
    %495 = vmatprep.subr.bf16.mxu0 0
    %496 = vmatpush1.bf16.msra.mxu0 0
    %497 = vmatprep.subr.bf16.mxu0 0
    %498 = vmatpush1.bf16.msra.mxu0 0
    %499 = vmatprep.subr.bf16.mxu0 0
    %500 = vmatpush1.bf16.msra.mxu0 0
    %501 = vmatprep.subr.bf16.mxu0 0
    %502 = vmatpush1.bf16.msra.mxu0 0
    %503 = vmatprep.subr.bf16.mxu0 0
    %504 = vmatpush1.bf16.msra.mxu0 0
    %505 = vmatprep.subr.bf16.mxu0 0
    %506 = vmatpush1.bf16.msra.mxu0 0
    %507 = vmatprep.mubr.bf16.mxu0 0
    %508 = vmatmul.mubr.bf16.gmra.mrb[0].mxu0 %v47
    %v509 = vpop.f32.mrb[0].mxu0
    %v510 = vadd.f32 %v118, %v509
    %v511 = vpop.f32.mrb[0].mxu0
    %v512 = vadd.f32 %v122, %v511
    %v513 = vpop.f32.mrb[0].mxu0
    %v514 = vadd.f32 %v118, %v513
    %v515 = vpop.f32.mrb[0].mxu0
    %v516 = vadd.f32 %v122, %v515
    %517 = vmatprep.mubr.bf16.mxu0 0
    %518 = vmatmul.mubr.bf16.gmra.mrb[0].mxu0 %v48
    %v519 = vpop.f32.mrb[0].mxu0
    %v520 = vadd.f32 %v118, %v519
    %v521 = vpop.f32.mrb[0].mxu0
    %v522 = vadd.f32 %v122, %v521
    %v523 = vpop.f32.mrb[0].mxu0
    %v524 = vadd.f32 %v118, %v523
    %v525 = vpop.f32.mrb[0].mxu0
    %v526 = vadd.f32 %v122, %v525
    %527 = vdwg.mxu0
    %v528 = vmax.f32 %v404, 0.0
    %v529 = vmax.f32 %v406, 0.0
    %v530 = vmax.f32 %v457, 0.0
    %v531 = vmax.f32 %v459, 0.0
    %v532 = vmax.f32 %v510, 0.0
    %v533 = vmax.f32 %v512, 0.0
    %v534 = vmax.f32 %v408, 0.0
    %v535 = vmax.f32 %v410, 0.0
    %v536 = vmax.f32 %v461, 0.0
    %v537 = vmax.f32 %v463, 0.0
    %v538 = vmax.f32 %v514, 0.0
    %v539 = vmax.f32 %v516, 0.0
    %v540 = vmax.f32 %v414, 0.0
    %v541 = vmax.f32 %v416, 0.0
    %v542 = vmax.f32 %v467, 0.0
    %v543 = vmax.f32 %v469, 0.0
    %v544 = vmax.f32 %v520, 0.0
    %v545 = vmax.f32 %v522, 0.0
    %v546 = vmax.f32 %v418, 0.0
    %v547 = vmax.f32 %v420, 0.0
    %v548 = vmax.f32 %v471, 0.0
    %v549 = vmax.f32 %v473, 0.0
    %v550 = vmax.f32 %v524, 0.0
    %v551 = vmax.f32 %v526, 0.0
    %v552 = vmin.f32 %v528, 6.0
    %v553 = vmin.f32 %v529, 6.0
    %v554 = vmin.f32 %v530, 6.0
    %v555 = vmin.f32 %v531, 6.0
    %v556 = vmin.f32 %v532, 6.0
    %v557 = vmin.f32 %v533, 6.0
    %v558 = vmin.f32 %v534, 6.0
    %v559 = vmin.f32 %v535, 6.0
    %v560 = vmin.f32 %v536, 6.0
    %v561 = vmin.f32 %v537, 6.0
    %v562 = vmin.f32 %v538, 6.0
    %v563 = vmin.f32 %v539, 6.0
    %v564 = vmin.f32 %v540, 6.0
    %v565 = vmin.f32 %v541, 6.0
    %v566 = vmin.f32 %v542, 6.0
    %v567 = vmin.f32 %v543, 6.0
    %v568 = vmin.f32 %v544, 6.0
    %v569 = vmin.f32 %v545, 6.0
    %v570 = vmin.f32 %v546, 6.0
    %v571 = vmin.f32 %v547, 6.0
    %v572 = vmin.f32 %v548, 6.0
    %v573 = vmin.f32 %v549, 6.0
    %v574 = vmin.f32 %v550, 6.0
    %v575 = vmin.f32 %v551, 6.0
    %v576 = vpack.c.bf16 %v558, %v552
    %v577 = vpack.c.bf16 %v559, %v553
    %v578 = vpack.c.bf16 %v560, %v554
    %v579 = vpack.c.bf16 %v561, %v555
    %v580 = vpack.c.bf16 %v562, %v556
    %v581 = vpack.c.bf16 %v563, %v557
    %v582 = vpack.c.bf16 %v570, %v564
    %v583 = vpack.c.bf16 %v571, %v565
    %v584 = vpack.c.bf16 %v572, %v566
    %v585 = vpack.c.bf16 %v573, %v567
    %v586 = vpack.c.bf16 %v574, %v568
    %v587 = vpack.c.bf16 %v575, %v569
    %v588 = vlaneseq
    %v589 = vshrl.u32 %v588, 7
    %v590 = vadd.s32 %v589, 8
    %v591 = vadd.s32 %v589, 16
    %v592 = vadd.s32 %v589, 24
    %vm593 = vcmp.lt.s32.totalorder %v589, 0
    %v594 = vsub.s32 0, %v589
    %v595 = vsel %vm593, %v594, %v589
    %v596 = vshrl.u32 %v595, 4
    %v597 = vand.u32 %v595, 15
    %v598 = vsub.s32 0, %v597
    %v599 = vsel %vm593, %v598, %v597
    %vm600 = vcmp.lt.s32.totalorder %v590, 0
    %v601 = vsub.s32 0, %v590
    %v602 = vsel %vm600, %v601, %v590
    %v603 = vshrl.u32 %v602, 4
    %v604 = vand.u32 %v602, 15
    %v605 = vsub.s32 0, %v604
    %v606 = vsel %vm600, %v605, %v604
    %vm607 = vcmp.lt.s32.totalorder %v591, 0
    %v608 = vsub.s32 0, %v591
    %v609 = vsel %vm607, %v608, %v591
    %v610 = vshrl.u32 %v609, 4
    %v611 = vand.u32 %v609, 15
    %v612 = vsub.s32 0, %v611
    %v613 = vsel %vm607, %v612, %v611
    %vm614 = vcmp.lt.s32.totalorder %v592, 0
    %v615 = vsub.s32 0, %v592
    %v616 = vsel %vm614, %v615, %v592
    %v617 = vshrl.u32 %v616, 4
    %v618 = vand.u32 %v616, 15
    %v619 = vsub.s32 0, %v618
    %v620 = vsel %vm614, %v619, %v618
    %vm621 = vcmp.ne.s32.totalorder %v599, 0
    %vm622 = vcmp.ne.s32.totalorder %v606, 0
    %vm623 = vcmp.ne.s32.totalorder %v613, 0
    %vm624 = vcmp.ne.s32.totalorder %v620, 0
    %vm625 = vcmp.lt.s32.totalorder %v599, 0
    %vm626 = vcmp.lt.s32.totalorder %v606, 0
    %vm627 = vcmp.lt.s32.totalorder %v613, 0
    %vm628 = vcmp.lt.s32.totalorder %v620, 0
    %vm629 = vmand %vm625, %vm621
    %vm630 = vmand %vm626, %vm622
    %vm631 = vmand %vm627, %vm623
    %vm632 = vmand %vm628, %vm624
    %v633 = vadd.s32 %v599, 16
    %v634 = vadd.s32 %v606, 16
    %v635 = vadd.s32 %v613, 16
    %v636 = vadd.s32 %v620, 16
    %v637 = vsel %vm629, %v633, %v599
    %v638 = vsel %vm630, %v634, %v606
    %v639 = vsel %vm631, %v635, %v613
    %v640 = vsel %vm632, %v636, %v620
    %vm641 = vcmp.gt.s32.totalorder %v637, 0
    %vm642 = vcmp.gt.s32.totalorder %v638, 0
    %vm643 = vcmp.gt.s32.totalorder %v639, 0
    %vm644 = vcmp.gt.s32.totalorder %v640, 0
    %vm645 = vcmp.lt.s32.totalorder %v637, 15
    %vm646 = vcmp.lt.s32.totalorder %v638, 15
    %vm647 = vcmp.lt.s32.totalorder %v639, 15
    %vm648 = vcmp.lt.s32.totalorder %v640, 15
    %661 = vrot.lane.b32.xlu0 %v576, 48
    %v662 = vpop.permute.xlu0 %661
    %663 = vrot.lane.b32.xlu0 %v577, 48
    %v664 = vpop.permute.xlu0 %663
    %665 = vrot.lane.b32.xlu0 %v578, 48
    %v666 = vpop.permute.xlu0 %665
    %667 = vrot.lane.b32.xlu0 %v579, 48
    %v668 = vpop.permute.xlu0 %667
    %669 = vrot.lane.b32.xlu0 %v580, 48
    %v670 = vpop.permute.xlu0 %669
    %671 = vrot.lane.b32.xlu0 %v581, 48
    %v672 = vpop.permute.xlu0 %671
    %673 = vrot.lane.b32.xlu0 %v582, 48
    %v674 = vpop.permute.xlu0 %673
    %675 = vrot.lane.b32.xlu0 %v583, 48
    %v676 = vpop.permute.xlu0 %675
    %677 = vrot.lane.b32.xlu0 %v584, 48
    %v678 = vpop.permute.xlu0 %677
    %679 = vrot.lane.b32.xlu0 %v585, 48
    %v680 = vpop.permute.xlu0 %679
    %681 = vrot.lane.b32.xlu0 %v586, 48
    %v682 = vpop.permute.xlu0 %681
    %683 = vrot.lane.b32.xlu0 %v587, 48
    %v684 = vpop.permute.xlu0 %683
    %vm685 = vcmask 392192
    %v686 = vsel %vm685, %v662, %v664
    %v687 = vsel %vm685, %v664, %v666
    %v688 = vsel %vm685, %v666, %v668
    %v689 = vsel %vm685, %v668, %v670
    %v690 = vsel %vm685, %v670, %v672
    %v691 = vsel %vm685, %v674, %v676
    %v692 = vsel %vm685, %v676, %v678
    %v693 = vsel %vm685, %v678, %v680
    %v694 = vsel %vm685, %v680, %v682
    %v695 = vsel %vm685, %v682, %v684
    %vm706 = vcmask 392192
    %v709 = vsel %vm706, 0, %v662
    %v712 = vsel %vm706, 0, %v674
    %vm714 = vsmask.f32 256
    %v715 = vshrl.u32 %v709, 16
    %v717 = vrot.slane %v715, 7
    %v718 = vshll.u32 %v709, 16
    %v720 = vor.u32 %v717, %v718
    %v722 = vshrl.u32 %v686, 16
    %v724 = vrot.slane %v722, 7
    %v725 = vshll.u32 %v686, 16
    %v727 = vor.u32 %v724, %v725
    %v729 = vshrl.u32 %v687, 16
    %v731 = vrot.slane %v729, 7
    %v732 = vshll.u32 %v687, 16
    %v734 = vor.u32 %v731, %v732
    %v736 = vshrl.u32 %v688, 16
    %v738 = vrot.slane %v736, 7
    %v739 = vshll.u32 %v688, 16
    %v741 = vor.u32 %v738, %v739
    %v743 = vshrl.u32 %v689, 16
    %v745 = vrot.slane %v743, 7
    %v746 = vshll.u32 %v689, 16
    %v748 = vor.u32 %v745, %v746
    %v750 = vshrl.u32 %v690, 16
    %v752 = vrot.slane %v750, 7
    %v753 = vshll.u32 %v690, 16
    %v755 = vor.u32 %v752, %v753
    %v756 = vshrl.u32 %v712, 16
    %v758 = vrot.slane %v756, 7
    %v759 = vshll.u32 %v712, 16
    %v761 = vor.u32 %v758, %v759
    %v762 = vsel %vm714, %v717, %v761
    %v764 = vshrl.u32 %v691, 16
    %v766 = vrot.slane %v764, 7
    %v767 = vshll.u32 %v691, 16
    %v769 = vor.u32 %v766, %v767
    %v770 = vsel %vm714, %v724, %v769
    %v772 = vshrl.u32 %v692, 16
    %v774 = vrot.slane %v772, 7
    %v775 = vshll.u32 %v692, 16
    %v777 = vor.u32 %v774, %v775
    %v778 = vsel %vm714, %v731, %v777
    %v780 = vshrl.u32 %v693, 16
    %v782 = vrot.slane %v780, 7
    %v783 = vshll.u32 %v693, 16
    %v785 = vor.u32 %v782, %v783
    %v786 = vsel %vm714, %v738, %v785
    %v788 = vshrl.u32 %v694, 16
    %v790 = vrot.slane %v788, 7
    %v791 = vshll.u32 %v694, 16
    %v793 = vor.u32 %v790, %v791
    %v794 = vsel %vm714, %v745, %v793
    %v796 = vshrl.u32 %v695, 16
    %v798 = vrot.slane %v796, 7
    %v799 = vshll.u32 %v695, 16
    %v801 = vor.u32 %v798, %v799
    %v802 = vsel %vm714, %v752, %v801
    %vm815 = vcmask 1040384
    %vm816 = vmand %vm815, %vm714
    %v817 = vsel %vm816, 0, %v720
    %v818 = vsel %vm816, 0, %v727
    %v819 = vsel %vm816, 0, %v734
    %v820 = vsel %vm816, 0, %v741
    %v821 = vsel %vm816, 0, %v748
    %v822 = vsel %vm816, 0, %v755
    %v823 = vsel %vm641, 1, 0
    %v824 = vsel %vm642, 1, 0
    %v825 = vsel %vm643, 1, 0
    %v826 = vsel %vm644, 1, 0
    %vm827 = vcmp.eq.s32.totalorder %v823, 1
    %vm828 = vcmp.eq.s32.totalorder %v824, 1
    %vm829 = vcmp.eq.s32.totalorder %v825, 1
    %vm830 = vcmp.eq.s32.totalorder %v826, 1
    %vm831 = vmpackc.low %vm827, %vm827
    %vm832 = vmpackc.low %vm828, %vm828
    %vm833 = vmpackc.low %vm829, %vm829
    %vm834 = vmpackc.low %vm830, %vm830
    %v835 = vsel %vm831, 65537, 0
    %v836 = vsel %vm832, 65537, 0
    %v837 = vsel %vm833, 65537, 0
    %v838 = vsel %vm834, 65537, 0
    %v839 = vunpack.c.l.b16 %v835
    %v840 = vunpack.c.l.b16 %v836
    %v841 = vunpack.c.l.b16 %v837
    %v842 = vunpack.c.l.b16 %v838
    %v843 = vpack.c.b16 %v840, %v839
    %v844 = vpack.c.b16 %v842, %v841
    %vm845 = vcmp.ne.s16.totalorder %v843, 0
    %vm846 = vcmp.ne.s16.totalorder %v844, 0
    %v847 = vsel %vm845, %v817, 0
    %v848 = vsel %vm845, %v818, 0
    %v849 = vsel %vm845, %v819, 0
    %v850 = vsel %vm845, %v820, 0
    %v851 = vsel %vm845, %v821, 0
    %v852 = vsel %vm845, %v822, 0
    %v853 = vsel %vm846, %v762, 0
    %v854 = vsel %vm846, %v770, 0
    %v855 = vsel %vm846, %v778, 0
    %v856 = vsel %vm846, %v786, 0
    %v857 = vsel %vm846, %v794, 0
    %v858 = vsel %vm846, %v802, 0
    %v859 = vld [vmem:[#allocation2] sm:$0x11]
    %v860 = vld [vmem:[#allocation2 + $0x8] sm:$0x11]
    %v861 = vld [vmem:[#allocation2 + $0x10] sm:$0x11]
    %v865 = vunpack.c.l.b16 %v859
    %v866 = vunpack.c.h.b16 %v859
    %v867 = vunpack.c.l.b16 %v860
    %v868 = vunpack.c.h.b16 %v860
    %v869 = vunpack.c.l.b16 %v861
    %v870 = vunpack.c.h.b16 %v861
    %v871 = vpack.c.b16 %v865, %v865
    %v872 = vpack.c.b16 %v866, %v866
    %v873 = vpack.c.b16 %v867, %v867
    %v874 = vpack.c.b16 %v868, %v868
    %v875 = vpack.c.b16 %v869, %v869
    %v876 = vpack.c.b16 %v870, %v870
    %v878 = vpack.i.b16 %v871, %v871
    %v880 = vlaneseq
    %v881 = vshrl.u32 %v880, 7
    %v882 = vsub.s32 0, %v881
    %v883 = vrot.slane %v878, %v882
    %v885 = vpack.i.b16 %v872, %v872
    %v887 = vlaneseq
    %v888 = vshrl.u32 %v887, 7
    %v889 = vsub.s32 0, %v888
    %v890 = vrot.slane %v885, %v889
    %v892 = vpack.i.b16 %v873, %v873
    %v894 = vlaneseq
    %v895 = vshrl.u32 %v894, 7
    %v896 = vsub.s32 0, %v895
    %v897 = vrot.slane %v892, %v896
    %v899 = vpack.i.b16 %v874, %v874
    %v901 = vlaneseq
    %v902 = vshrl.u32 %v901, 7
    %v903 = vsub.s32 0, %v902
    %v904 = vrot.slane %v899, %v903
    %v906 = vpack.i.b16 %v875, %v875
    %v908 = vlaneseq
    %v909 = vshrl.u32 %v908, 7
    %v910 = vsub.s32 0, %v909
    %v911 = vrot.slane %v906, %v910
    %v913 = vpack.i.b16 %v876, %v876
    %v915 = vlaneseq
    %v916 = vshrl.u32 %v915, 7
    %v917 = vsub.s32 0, %v916
    %v918 = vrot.slane %v913, %v917
    %v919 = vmul.bf16 %v847, %v883
    %v920 = vmul.bf16 %v848, %v890
    %v921 = vmul.bf16 %v849, %v897
    %v922 = vmul.bf16 %v850, %v904
    %v923 = vmul.bf16 %v851, %v911
    %v924 = vmul.bf16 %v852, %v918
    %v925 = vmul.bf16 %v853, %v883
    %v926 = vmul.bf16 %v854, %v890
    %v927 = vmul.bf16 %v855, %v897
    %v928 = vmul.bf16 %v856, %v904
    %v929 = vmul.bf16 %v857, %v911
    %v930 = vmul.bf16 %v858, %v918
    %v931 = vadd.bf16 %v919, 0
    %v932 = vadd.bf16 %v920, 0
    %v933 = vadd.bf16 %v921, 0
    %v934 = vadd.bf16 %v922, 0
    %v935 = vadd.bf16 %v923, 0
    %v936 = vadd.bf16 %v924, 0
    %v937 = vadd.bf16 %v925, 0
    %v938 = vadd.bf16 %v926, 0
    %v939 = vadd.bf16 %v927, 0
    %v940 = vadd.bf16 %v928, 0
    %v941 = vadd.bf16 %v929, 0
    %v942 = vadd.bf16 %v930, 0
    %v943 = vld [vmem:[#allocation2] sm:$0x22]
    %v944 = vld [vmem:[#allocation2 + $0x8] sm:$0x22]
    %v945 = vld [vmem:[#allocation2 + $0x10] sm:$0x22]
    %v949 = vunpack.c.l.b16 %v943
    %v950 = vunpack.c.h.b16 %v943
    %v951 = vunpack.c.l.b16 %v944
    %v952 = vunpack.c.h.b16 %v944
    %v953 = vunpack.c.l.b16 %v945
    %v954 = vunpack.c.h.b16 %v945
    %v955 = vpack.c.b16 %v949, %v949
    %v956 = vpack.c.b16 %v950, %v950
    %v957 = vpack.c.b16 %v951, %v951
    %v958 = vpack.c.b16 %v952, %v952
    %v959 = vpack.c.b16 %v953, %v953
    %v960 = vpack.c.b16 %v954, %v954
    %v962 = vshrl.u32 %v955, 16
    %v963 = vpack.i.b16 %v962, %v962
    %v965 = vlaneseq
    %v966 = vshrl.u32 %v965, 7
    %v967 = vsub.s32 1, %v966
    %v968 = vrot.slane %v963, %v967
    %v970 = vshrl.u32 %v956, 16
    %v971 = vpack.i.b16 %v970, %v970
    %v973 = vlaneseq
    %v974 = vshrl.u32 %v973, 7
    %v975 = vsub.s32 1, %v974
    %v976 = vrot.slane %v971, %v975
    %v978 = vshrl.u32 %v957, 16
    %v979 = vpack.i.b16 %v978, %v978
    %v981 = vlaneseq
    %v982 = vshrl.u32 %v981, 7
    %v983 = vsub.s32 1, %v982
    %v984 = vrot.slane %v979, %v983
    %v986 = vshrl.u32 %v958, 16
    %v987 = vpack.i.b16 %v986, %v986
    %v989 = vlaneseq
    %v990 = vshrl.u32 %v989, 7
    %v991 = vsub.s32 1, %v990
    %v992 = vrot.slane %v987, %v991
    %v994 = vshrl.u32 %v959, 16
    %v995 = vpack.i.b16 %v994, %v994
    %v997 = vlaneseq
    %v998 = vshrl.u32 %v997, 7
    %v999 = vsub.s32 1, %v998
    %v1000 = vrot.slane %v995, %v999
    %v1002 = vshrl.u32 %v960, 16
    %v1003 = vpack.i.b16 %v1002, %v1002
    %v1005 = vlaneseq
    %v1006 = vshrl.u32 %v1005, 7
    %v1007 = vsub.s32 1, %v1006
    %v1008 = vrot.slane %v1003, %v1007
    %v1009 = vmul.bf16 %v709, %v968
    %v1010 = vmul.bf16 %v686, %v976
    %v1011 = vmul.bf16 %v687, %v984
    %v1012 = vmul.bf16 %v688, %v992
    %v1013 = vmul.bf16 %v689, %v1000
    %v1014 = vmul.bf16 %v690, %v1008
    %v1015 = vmul.bf16 %v712, %v968
    %v1016 = vmul.bf16 %v691, %v976
    %v1017 = vmul.bf16 %v692, %v984
    %v1018 = vmul.bf16 %v693, %v992
    %v1019 = vmul.bf16 %v694, %v1000
    %v1020 = vmul.bf16 %v695, %v1008
    %v1021 = vadd.bf16 %v931, %v1009
    %v1022 = vadd.bf16 %v932, %v1010
    %v1023 = vadd.bf16 %v933, %v1011
    %v1024 = vadd.bf16 %v934, %v1012
    %v1025 = vadd.bf16 %v935, %v1013
    %v1026 = vadd.bf16 %v936, %v1014
    %v1027 = vadd.bf16 %v937, %v1015
    %v1028 = vadd.bf16 %v938, %v1016
    %v1029 = vadd.bf16 %v939, %v1017
    %v1030 = vadd.bf16 %v940, %v1018
    %v1031 = vadd.bf16 %v941, %v1019
    %v1032 = vadd.bf16 %v942, %v1020
    %vm1033 = vsmask.f32 7424
    %v1034 = vrot.slane %v718, 1
    %v1035 = vor.u32 %v715, %v1034
    %v1036 = vrot.slane %v759, 1
    %v1037 = vsel %vm1033, %v1035, %v1036
    %v1038 = vrot.slane %v725, 1
    %v1039 = vor.u32 %v722, %v1038
    %v1040 = vrot.slane %v767, 1
    %v1041 = vsel %vm1033, %v1039, %v1040
    %v1042 = vrot.slane %v732, 1
    %v1043 = vor.u32 %v729, %v1042
    %v1044 = vrot.slane %v775, 1
    %v1045 = vsel %vm1033, %v1043, %v1044
    %v1046 = vrot.slane %v739, 1
    %v1047 = vor.u32 %v736, %v1046
    %v1048 = vrot.slane %v783, 1
    %v1049 = vsel %vm1033, %v1047, %v1048
    %v1050 = vrot.slane %v746, 1
    %v1051 = vor.u32 %v743, %v1050
    %v1052 = vrot.slane %v791, 1
    %v1053 = vsel %vm1033, %v1051, %v1052
    %v1054 = vrot.slane %v753, 1
    %v1055 = vor.u32 %v750, %v1054
    %v1056 = vrot.slane %v799, 1
    %v1057 = vsel %vm1033, %v1055, %v1056
    %v1058 = vor.u32 %v756, %v1036
    %v1059 = vor.u32 %v764, %v1040
    %v1060 = vor.u32 %v772, %v1044
    %v1061 = vor.u32 %v780, %v1048
    %v1062 = vor.u32 %v788, %v1052
    %v1063 = vor.u32 %v796, %v1056
    %vm1076 = vcmask 1047552
    %vm1077 = vmand %vm1076, %vm1033
    %v1078 = vsel %vm1077, %v1058, 0
    %v1079 = vsel %vm1077, %v1059, 0
    %v1080 = vsel %vm1077, %v1060, 0
    %v1081 = vsel %vm1077, %v1061, 0
    %v1082 = vsel %vm1077, %v1062, 0
    %v1083 = vsel %vm1077, %v1063, 0
    %v1084 = vsel %vm645, 1, 0
    %v1085 = vsel %vm646, 1, 0
    %v1086 = vsel %vm647, 1, 0
    %v1087 = vsel %vm648, 1, 0
    %vm1088 = vcmp.eq.s32.totalorder %v1084, 1
    %vm1089 = vcmp.eq.s32.totalorder %v1085, 1
    %vm1090 = vcmp.eq.s32.totalorder %v1086, 1
    %vm1091 = vcmp.eq.s32.totalorder %v1087, 1
    %vm1092 = vmpackc.low %vm1088, %vm1088
    %vm1093 = vmpackc.low %vm1089, %vm1089
    %vm1094 = vmpackc.low %vm1090, %vm1090
    %vm1095 = vmpackc.low %vm1091, %vm1091
    %v1096 = vsel %vm1092, 65537, 0
    %v1097 = vsel %vm1093, 65537, 0
    %v1098 = vsel %vm1094, 65537, 0
    %v1099 = vsel %vm1095, 65537, 0
    %v1100 = vunpack.c.l.b16 %v1096
    %v1101 = vunpack.c.l.b16 %v1097
    %v1102 = vunpack.c.l.b16 %v1098
    %v1103 = vunpack.c.l.b16 %v1099
    %v1104 = vpack.c.b16 %v1101, %v1100
    %v1105 = vpack.c.b16 %v1103, %v1102
    %vm1106 = vcmp.ne.s16.totalorder %v1104, 0
    %vm1107 = vcmp.ne.s16.totalorder %v1105, 0
    %v1108 = vsel %vm1106, %v1037, 0
    %v1109 = vsel %vm1106, %v1041, 0
    %v1110 = vsel %vm1106, %v1045, 0
    %v1111 = vsel %vm1106, %v1049, 0
    %v1112 = vsel %vm1106, %v1053, 0
    %v1113 = vsel %vm1106, %v1057, 0
    %v1114 = vsel %vm1107, %v1078, 0
    %v1115 = vsel %vm1107, %v1079, 0
    %v1116 = vsel %vm1107, %v1080, 0
    %v1117 = vsel %vm1107, %v1081, 0
    %v1118 = vsel %vm1107, %v1082, 0
    %v1119 = vsel %vm1107, %v1083, 0
    %v1120 = vld [vmem:[#allocation2] sm:$0x88]
    %v1121 = vld [vmem:[#allocation2 + $0x8] sm:$0x88]
    %v1122 = vld [vmem:[#allocation2 + $0x10] sm:$0x88]
    %v1126 = vunpack.c.l.b16 %v1120
    %v1127 = vunpack.c.h.b16 %v1120
    %v1128 = vunpack.c.l.b16 %v1121
    %v1129 = vunpack.c.h.b16 %v1121
    %v1130 = vunpack.c.l.b16 %v1122
    %v1131 = vunpack.c.h.b16 %v1122
    %v1132 = vpack.c.b16 %v1126, %v1126
    %v1133 = vpack.c.b16 %v1127, %v1127
    %v1134 = vpack.c.b16 %v1128, %v1128
    %v1135 = vpack.c.b16 %v1129, %v1129
    %v1136 = vpack.c.b16 %v1130, %v1130
    %v1137 = vpack.c.b16 %v1131, %v1131
    %v1139 = vpack.i.b16 %v1132, %v1132
    %v1141 = vlaneseq
    %v1142 = vshrl.u32 %v1141, 7
    %v1143 = vsub.s32 3, %v1142
    %v1144 = vrot.slane %v1139, %v1143
    %v1146 = vpack.i.b16 %v1133, %v1133
    %v1148 = vlaneseq
    %v1149 = vshrl.u32 %v1148, 7
    %v1150 = vsub.s32 3, %v1149
    %v1151 = vrot.slane %v1146, %v1150
    %v1153 = vpack.i.b16 %v1134, %v1134
    %v1155 = vlaneseq
    %v1156 = vshrl.u32 %v1155, 7
    %v1157 = vsub.s32 3, %v1156
    %v1158 = vrot.slane %v1153, %v1157
    %v1160 = vpack.i.b16 %v1135, %v1135
    %v1162 = vlaneseq
    %v1163 = vshrl.u32 %v1162, 7
    %v1164 = vsub.s32 3, %v1163
    %v1165 = vrot.slane %v1160, %v1164
    %v1167 = vpack.i.b16 %v1136, %v1136
    %v1169 = vlaneseq
    %v1170 = vshrl.u32 %v1169, 7
    %v1171 = vsub.s32 3, %v1170
    %v1172 = vrot.slane %v1167, %v1171
    %v1174 = vpack.i.b16 %v1137, %v1137
    %v1176 = vlaneseq
    %v1177 = vshrl.u32 %v1176, 7
    %v1178 = vsub.s32 3, %v1177
    %v1179 = vrot.slane %v1174, %v1178
    %v1180 = vmul.bf16 %v1108, %v1144
    %v1181 = vmul.bf16 %v1109, %v1151
    %v1182 = vmul.bf16 %v1110, %v1158
    %v1183 = vmul.bf16 %v1111, %v1165
    %v1184 = vmul.bf16 %v1112, %v1172
    %v1185 = vmul.bf16 %v1113, %v1179
    %v1186 = vmul.bf16 %v1114, %v1144
    %v1187 = vmul.bf16 %v1115, %v1151
    %v1188 = vmul.bf16 %v1116, %v1158
    %v1189 = vmul.bf16 %v1117, %v1165
    %v1190 = vmul.bf16 %v1118, %v1172
    %v1191 = vmul.bf16 %v1119, %v1179
    %v1192 = vadd.bf16 %v1021, %v1180
    %v1193 = vadd.bf16 %v1022, %v1181
    %v1194 = vadd.bf16 %v1023, %v1182
    %v1195 = vadd.bf16 %v1024, %v1183
    %v1196 = vadd.bf16 %v1025, %v1184
    %v1197 = vadd.bf16 %v1026, %v1185
    %v1198 = vadd.bf16 %v1027, %v1186
    %v1199 = vadd.bf16 %v1028, %v1187
    %v1200 = vadd.bf16 %v1029, %v1188
    %v1201 = vadd.bf16 %v1030, %v1189
    %v1202 = vadd.bf16 %v1031, %v1190
    %v1203 = vadd.bf16 %v1032, %v1191
    %v1205 = vshrl.u32 %v576, 16
    %v1207 = vrot.slane %v1205, 7
    %v1208 = vshll.u32 %v576, 16
    %v1210 = vor.u32 %v1207, %v1208
    %v1212 = vshrl.u32 %v577, 16
    %v1214 = vrot.slane %v1212, 7
    %v1215 = vshll.u32 %v577, 16
    %v1217 = vor.u32 %v1214, %v1215
    %v1219 = vshrl.u32 %v578, 16
    %v1221 = vrot.slane %v1219, 7
    %v1222 = vshll.u32 %v578, 16
    %v1224 = vor.u32 %v1221, %v1222
    %v1226 = vshrl.u32 %v579, 16
    %v1228 = vrot.slane %v1226, 7
    %v1229 = vshll.u32 %v579, 16
    %v1231 = vor.u32 %v1228, %v1229
    %v1233 = vshrl.u32 %v580, 16
    %v1235 = vrot.slane %v1233, 7
    %v1236 = vshll.u32 %v580, 16
    %v1238 = vor.u32 %v1235, %v1236
    %v1240 = vshrl.u32 %v581, 16
    %v1242 = vrot.slane %v1240, 7
    %v1243 = vshll.u32 %v581, 16
    %v1245 = vor.u32 %v1242, %v1243
    %v1247 = vshrl.u32 %v582, 16
    %v1249 = vrot.slane %v1247, 7
    %v1250 = vshll.u32 %v582, 16
    %v1252 = vor.u32 %v1249, %v1250
    %v1253 = vsel %vm714, %v1207, %v1252
    %v1255 = vshrl.u32 %v583, 16
    %v1257 = vrot.slane %v1255, 7
    %v1258 = vshll.u32 %v583, 16
    %v1260 = vor.u32 %v1257, %v1258
    %v1261 = vsel %vm714, %v1214, %v1260
    %v1263 = vshrl.u32 %v584, 16
    %v1265 = vrot.slane %v1263, 7
    %v1266 = vshll.u32 %v584, 16
    %v1268 = vor.u32 %v1265, %v1266
    %v1269 = vsel %vm714, %v1221, %v1268
    %v1271 = vshrl.u32 %v585, 16
    %v1273 = vrot.slane %v1271, 7
    %v1274 = vshll.u32 %v585, 16
    %v1276 = vor.u32 %v1273, %v1274
    %v1277 = vsel %vm714, %v1228, %v1276
    %v1279 = vshrl.u32 %v586, 16
    %v1281 = vrot.slane %v1279, 7
    %v1282 = vshll.u32 %v586, 16
    %v1284 = vor.u32 %v1281, %v1282
    %v1285 = vsel %vm714, %v1235, %v1284
    %v1287 = vshrl.u32 %v587, 16
    %v1289 = vrot.slane %v1287, 7
    %v1290 = vshll.u32 %v587, 16
    %v1292 = vor.u32 %v1289, %v1290
    %v1293 = vsel %vm714, %v1242, %v1292
    %v1306 = vsel %vm816, 0, %v1210
    %v1307 = vsel %vm816, 0, %v1217
    %v1308 = vsel %vm816, 0, %v1224
    %v1309 = vsel %vm816, 0, %v1231
    %v1310 = vsel %vm816, 0, %v1238
    %v1311 = vsel %vm816, 0, %v1245
    %v1312 = vsel %vm845, %v1306, 0
    %v1313 = vsel %vm845, %v1307, 0
    %v1314 = vsel %vm845, %v1308, 0
    %v1315 = vsel %vm845, %v1309, 0
    %v1316 = vsel %vm845, %v1310, 0
    %v1317 = vsel %vm845, %v1311, 0
    %v1318 = vsel %vm846, %v1253, 0
    %v1319 = vsel %vm846, %v1261, 0
    %v1320 = vsel %vm846, %v1269, 0
    %v1321 = vsel %vm846, %v1277, 0
    %v1322 = vsel %vm846, %v1285, 0
    %v1323 = vsel %vm846, %v1293, 0
    %v1324 = vshrl.u32 %v871, 16
    %v1325 = vpack.i.b16 %v1324, %v1324
    %v1327 = vlaneseq
    %v1328 = vshrl.u32 %v1327, 7
    %v1329 = vsub.s32 0, %v1328
    %v1330 = vrot.slane %v1325, %v1329
    %v1331 = vshrl.u32 %v872, 16
    %v1332 = vpack.i.b16 %v1331, %v1331
    %v1334 = vlaneseq
    %v1335 = vshrl.u32 %v1334, 7
    %v1336 = vsub.s32 0, %v1335
    %v1337 = vrot.slane %v1332, %v1336
    %v1338 = vshrl.u32 %v873, 16
    %v1339 = vpack.i.b16 %v1338, %v1338
    %v1341 = vlaneseq
    %v1342 = vshrl.u32 %v1341, 7
    %v1343 = vsub.s32 0, %v1342
    %v1344 = vrot.slane %v1339, %v1343
    %v1345 = vshrl.u32 %v874, 16
    %v1346 = vpack.i.b16 %v1345, %v1345
    %v1348 = vlaneseq
    %v1349 = vshrl.u32 %v1348, 7
    %v1350 = vsub.s32 0, %v1349
    %v1351 = vrot.slane %v1346, %v1350
    %v1352 = vshrl.u32 %v875, 16
    %v1353 = vpack.i.b16 %v1352, %v1352
    %v1355 = vlaneseq
    %v1356 = vshrl.u32 %v1355, 7
    %v1357 = vsub.s32 0, %v1356
    %v1358 = vrot.slane %v1353, %v1357
    %v1359 = vshrl.u32 %v876, 16
    %v1360 = vpack.i.b16 %v1359, %v1359
    %v1362 = vlaneseq
    %v1363 = vshrl.u32 %v1362, 7
    %v1364 = vsub.s32 0, %v1363
    %v1365 = vrot.slane %v1360, %v1364
    %v1366 = vmul.bf16 %v1312, %v1330
    %v1367 = vmul.bf16 %v1313, %v1337
    %v1368 = vmul.bf16 %v1314, %v1344
    %v1369 = vmul.bf16 %v1315, %v1351
    %v1370 = vmul.bf16 %v1316, %v1358
    %v1371 = vmul.bf16 %v1317, %v1365
    %v1372 = vmul.bf16 %v1318, %v1330
    %v1373 = vmul.bf16 %v1319, %v1337
    %v1374 = vmul.bf16 %v1320, %v1344
    %v1375 = vmul.bf16 %v1321, %v1351
    %v1376 = vmul.bf16 %v1322, %v1358
    %v1377 = vmul.bf16 %v1323, %v1365
    %v1378 = vadd.bf16 %v1192, %v1366
    %v1379 = vadd.bf16 %v1193, %v1367
    %v1380 = vadd.bf16 %v1194, %v1368
    %v1381 = vadd.bf16 %v1195, %v1369
    %v1382 = vadd.bf16 %v1196, %v1370
    %v1383 = vadd.bf16 %v1197, %v1371
    %v1384 = vadd.bf16 %v1198, %v1372
    %v1385 = vadd.bf16 %v1199, %v1373
    %v1386 = vadd.bf16 %v1200, %v1374
    %v1387 = vadd.bf16 %v1201, %v1375
    %v1388 = vadd.bf16 %v1202, %v1376
    %v1389 = vadd.bf16 %v1203, %v1377
    %v1390 = vld [vmem:[#allocation2] sm:$0x44]
    %v1391 = vld [vmem:[#allocation2 + $0x8] sm:$0x44]
    %v1392 = vld [vmem:[#allocation2 + $0x10] sm:$0x44]
    %v1396 = vunpack.c.l.b16 %v1390
    %v1397 = vunpack.c.h.b16 %v1390
    %v1398 = vunpack.c.l.b16 %v1391
    %v1399 = vunpack.c.h.b16 %v1391
    %v1400 = vunpack.c.l.b16 %v1392
    %v1401 = vunpack.c.h.b16 %v1392
    %v1402 = vpack.c.b16 %v1396, %v1396
    %v1403 = vpack.c.b16 %v1397, %v1397
    %v1404 = vpack.c.b16 %v1398, %v1398
    %v1405 = vpack.c.b16 %v1399, %v1399
    %v1406 = vpack.c.b16 %v1400, %v1400
    %v1407 = vpack.c.b16 %v1401, %v1401
    %v1409 = vpack.i.b16 %v1402, %v1402
    %v1411 = vlaneseq
    %v1412 = vshrl.u32 %v1411, 7
    %v1413 = vsub.s32 2, %v1412
    %v1414 = vrot.slane %v1409, %v1413
    %v1416 = vpack.i.b16 %v1403, %v1403
    %v1418 = vlaneseq
    %v1419 = vshrl.u32 %v1418, 7
    %v1420 = vsub.s32 2, %v1419
    %v1421 = vrot.slane %v1416, %v1420
    %v1423 = vpack.i.b16 %v1404, %v1404
    %v1425 = vlaneseq
    %v1426 = vshrl.u32 %v1425, 7
    %v1427 = vsub.s32 2, %v1426
    %v1428 = vrot.slane %v1423, %v1427
    %v1430 = vpack.i.b16 %v1405, %v1405
    %v1432 = vlaneseq
    %v1433 = vshrl.u32 %v1432, 7
    %v1434 = vsub.s32 2, %v1433
    %v1435 = vrot.slane %v1430, %v1434
    %v1437 = vpack.i.b16 %v1406, %v1406
    %v1439 = vlaneseq
    %v1440 = vshrl.u32 %v1439, 7
    %v1441 = vsub.s32 2, %v1440
    %v1442 = vrot.slane %v1437, %v1441
    %v1444 = vpack.i.b16 %v1407, %v1407
    %v1446 = vlaneseq
    %v1447 = vshrl.u32 %v1446, 7
    %v1448 = vsub.s32 2, %v1447
    %v1449 = vrot.slane %v1444, %v1448
    %v1450 = vmul.bf16 %v576, %v1414
    %v1451 = vmul.bf16 %v577, %v1421
    %v1452 = vmul.bf16 %v578, %v1428
    %v1453 = vmul.bf16 %v579, %v1435
    %v1454 = vmul.bf16 %v580, %v1442
    %v1455 = vmul.bf16 %v581, %v1449
    %v1456 = vmul.bf16 %v582, %v1414
    %v1457 = vmul.bf16 %v583, %v1421
    %v1458 = vmul.bf16 %v584, %v1428
    %v1459 = vmul.bf16 %v585, %v1435
    %v1460 = vmul.bf16 %v586, %v1442
    %v1461 = vmul.bf16 %v587, %v1449
    %v1462 = vadd.bf16 %v1378, %v1450
    %v1463 = vadd.bf16 %v1379, %v1451
    %v1464 = vadd.bf16 %v1380, %v1452
    %v1465 = vadd.bf16 %v1381, %v1453
    %v1466 = vadd.bf16 %v1382, %v1454
    %v1467 = vadd.bf16 %v1383, %v1455
    %v1468 = vadd.bf16 %v1384, %v1456
    %v1469 = vadd.bf16 %v1385, %v1457
    %v1470 = vadd.bf16 %v1386, %v1458
    %v1471 = vadd.bf16 %v1387, %v1459
    %v1472 = vadd.bf16 %v1388, %v1460
    %v1473 = vadd.bf16 %v1389, %v1461
    %v1474 = vrot.slane %v1208, 1
    %v1475 = vor.u32 %v1205, %v1474
    %v1476 = vrot.slane %v1250, 1
    %v1477 = vsel %vm1033, %v1475, %v1476
    %v1478 = vrot.slane %v1215, 1
    %v1479 = vor.u32 %v1212, %v1478
    %v1480 = vrot.slane %v1258, 1
    %v1481 = vsel %vm1033, %v1479, %v1480
    %v1482 = vrot.slane %v1222, 1
    %v1483 = vor.u32 %v1219, %v1482
    %v1484 = vrot.slane %v1266, 1
    %v1485 = vsel %vm1033, %v1483, %v1484
    %v1486 = vrot.slane %v1229, 1
    %v1487 = vor.u32 %v1226, %v1486
    %v1488 = vrot.slane %v1274, 1
    %v1489 = vsel %vm1033, %v1487, %v1488
    %v1490 = vrot.slane %v1236, 1
    %v1491 = vor.u32 %v1233, %v1490
    %v1492 = vrot.slane %v1282, 1
    %v1493 = vsel %vm1033, %v1491, %v1492
    %v1494 = vrot.slane %v1243, 1
    %v1495 = vor.u32 %v1240, %v1494
    %v1496 = vrot.slane %v1290, 1
    %v1497 = vsel %vm1033, %v1495, %v1496
    %v1498 = vor.u32 %v1247, %v1476
    %v1499 = vor.u32 %v1255, %v1480
    %v1500 = vor.u32 %v1263, %v1484
    %v1501 = vor.u32 %v1271, %v1488
    %v1502 = vor.u32 %v1279, %v1492
    %v1503 = vor.u32 %v1287, %v1496
    %v1516 = vsel %vm1077, %v1498, 0
    %v1517 = vsel %vm1077, %v1499, 0
    %v1518 = vsel %vm1077, %v1500, 0
    %v1519 = vsel %vm1077, %v1501, 0
    %v1520 = vsel %vm1077, %v1502, 0
    %v1521 = vsel %vm1077, %v1503, 0
    %v1522 = vsel %vm1106, %v1477, 0
    %v1523 = vsel %vm1106, %v1481, 0
    %v1524 = vsel %vm1106, %v1485, 0
    %v1525 = vsel %vm1106, %v1489, 0
    %v1526 = vsel %vm1106, %v1493, 0
    %v1527 = vsel %vm1106, %v1497, 0
    %v1528 = vsel %vm1107, %v1516, 0
    %v1529 = vsel %vm1107, %v1517, 0
    %v1530 = vsel %vm1107, %v1518, 0
    %v1531 = vsel %vm1107, %v1519, 0
    %v1532 = vsel %vm1107, %v1520, 0
    %v1533 = vsel %vm1107, %v1521, 0
    %v1534 = vshrl.u32 %v1132, 16
    %v1535 = vpack.i.b16 %v1534, %v1534
    %v1537 = vlaneseq
    %v1538 = vshrl.u32 %v1537, 7
    %v1539 = vsub.s32 3, %v1538
    %v1540 = vrot.slane %v1535, %v1539
    %v1541 = vshrl.u32 %v1133, 16
    %v1542 = vpack.i.b16 %v1541, %v1541
    %v1544 = vlaneseq
    %v1545 = vshrl.u32 %v1544, 7
    %v1546 = vsub.s32 3, %v1545
    %v1547 = vrot.slane %v1542, %v1546
    %v1548 = vshrl.u32 %v1134, 16
    %v1549 = vpack.i.b16 %v1548, %v1548
    %v1551 = vlaneseq
    %v1552 = vshrl.u32 %v1551, 7
    %v1553 = vsub.s32 3, %v1552
    %v1554 = vrot.slane %v1549, %v1553
    %v1555 = vshrl.u32 %v1135, 16
    %v1556 = vpack.i.b16 %v1555, %v1555
    %v1558 = vlaneseq
    %v1559 = vshrl.u32 %v1558, 7
    %v1560 = vsub.s32 3, %v1559
    %v1561 = vrot.slane %v1556, %v1560
    %v1562 = vshrl.u32 %v1136, 16
    %v1563 = vpack.i.b16 %v1562, %v1562
    %v1565 = vlaneseq
    %v1566 = vshrl.u32 %v1565, 7
    %v1567 = vsub.s32 3, %v1566
    %v1568 = vrot.slane %v1563, %v1567
    %v1569 = vshrl.u32 %v1137, 16
    %v1570 = vpack.i.b16 %v1569, %v1569
    %v1572 = vlaneseq
    %v1573 = vshrl.u32 %v1572, 7
    %v1574 = vsub.s32 3, %v1573
    %v1575 = vrot.slane %v1570, %v1574
    %v1576 = vmul.bf16 %v1522, %v1540
    %v1577 = vmul.bf16 %v1523, %v1547
    %v1578 = vmul.bf16 %v1524, %v1554
    %v1579 = vmul.bf16 %v1525, %v1561
    %v1580 = vmul.bf16 %v1526, %v1568
    %v1581 = vmul.bf16 %v1527, %v1575
    %v1582 = vmul.bf16 %v1528, %v1540
    %v1583 = vmul.bf16 %v1529, %v1547
    %v1584 = vmul.bf16 %v1530, %v1554
    %v1585 = vmul.bf16 %v1531, %v1561
    %v1586 = vmul.bf16 %v1532, %v1568
    %v1587 = vmul.bf16 %v1533, %v1575
    %v1588 = vadd.bf16 %v1462, %v1576
    %v1589 = vadd.bf16 %v1463, %v1577
    %v1590 = vadd.bf16 %v1464, %v1578
    %v1591 = vadd.bf16 %v1465, %v1579
    %v1592 = vadd.bf16 %v1466, %v1580
    %v1593 = vadd.bf16 %v1467, %v1581
    %v1594 = vadd.bf16 %v1468, %v1582
    %v1595 = vadd.bf16 %v1469, %v1583
    %v1596 = vadd.bf16 %v1470, %v1584
    %v1597 = vadd.bf16 %v1471, %v1585
    %v1598 = vadd.bf16 %v1472, %v1586
    %v1599 = vadd.bf16 %v1473, %v1587
    %1600 = vrot.lane.b32.xlu0 %v576, 80
    %v1601 = vpop.permute.xlu0 %1600
    %1602 = vrot.lane.b32.xlu0 %v577, 80
    %v1603 = vpop.permute.xlu0 %1602
    %1604 = vrot.lane.b32.xlu0 %v578, 80
    %v1605 = vpop.permute.xlu0 %1604
    %1606 = vrot.lane.b32.xlu0 %v579, 80
    %v1607 = vpop.permute.xlu0 %1606
    %1608 = vrot.lane.b32.xlu0 %v580, 80
    %v1609 = vpop.permute.xlu0 %1608
    %1610 = vrot.lane.b32.xlu0 %v581, 80
    %v1611 = vpop.permute.xlu0 %1610
    %1612 = vrot.lane.b32.xlu0 %v582, 80
    %v1613 = vpop.permute.xlu0 %1612
    %1614 = vrot.lane.b32.xlu0 %v583, 80
    %v1615 = vpop.permute.xlu0 %1614
    %1616 = vrot.lane.b32.xlu0 %v584, 80
    %v1617 = vpop.permute.xlu0 %1616
    %1618 = vrot.lane.b32.xlu0 %v585, 80
    %v1619 = vpop.permute.xlu0 %1618
    %1620 = vrot.lane.b32.xlu0 %v586, 80
    %v1621 = vpop.permute.xlu0 %1620
    %1622 = vrot.lane.b32.xlu0 %v587, 80
    %v1623 = vpop.permute.xlu0 %1622
    %vm1624 = vcmask 654336
    %v1625 = vsel %vm1624, %v1601, %v1603
    %v1626 = vsel %vm1624, %v1603, %v1605
    %v1627 = vsel %vm1624, %v1605, %v1607
    %v1628 = vsel %vm1624, %v1607, %v1609
    %v1629 = vsel %vm1624, %v1609, %v1611
    %v1630 = vsel %vm1624, %v1613, %v1615
    %v1631 = vsel %vm1624, %v1615, %v1617
    %v1632 = vsel %vm1624, %v1617, %v1619
    %v1633 = vsel %vm1624, %v1619, %v1621
    %v1634 = vsel %vm1624, %v1621, %v1623
    %vm1645 = vcmask 654336
    %v1647 = vsel %vm1645, %v1611, 0
    %v1650 = vsel %vm1645, %v1623, 0
    %v1653 = vshrl.u32 %v1625, 16
    %v1655 = vrot.slane %v1653, 7
    %v1656 = vshll.u32 %v1625, 16
    %v1658 = vor.u32 %v1655, %v1656
    %v1660 = vshrl.u32 %v1626, 16
    %v1662 = vrot.slane %v1660, 7
    %v1663 = vshll.u32 %v1626, 16
    %v1665 = vor.u32 %v1662, %v1663
    %v1667 = vshrl.u32 %v1627, 16
    %v1669 = vrot.slane %v1667, 7
    %v1670 = vshll.u32 %v1627, 16
    %v1672 = vor.u32 %v1669, %v1670
    %v1674 = vshrl.u32 %v1628, 16
    %v1676 = vrot.slane %v1674, 7
    %v1677 = vshll.u32 %v1628, 16
    %v1679 = vor.u32 %v1676, %v1677
    %v1681 = vshrl.u32 %v1629, 16
    %v1683 = vrot.slane %v1681, 7
    %v1684 = vshll.u32 %v1629, 16
    %v1686 = vor.u32 %v1683, %v1684
    %v1687 = vshrl.u32 %v1647, 16
    %v1689 = vrot.slane %v1687, 7
    %v1690 = vshll.u32 %v1647, 16
    %v1692 = vor.u32 %v1689, %v1690
    %v1694 = vshrl.u32 %v1630, 16
    %v1696 = vrot.slane %v1694, 7
    %v1697 = vshll.u32 %v1630, 16
    %v1699 = vor.u32 %v1696, %v1697
    %v1700 = vsel %vm714, %v1655, %v1699
    %v1702 = vshrl.u32 %v1631, 16
    %v1704 = vrot.slane %v1702, 7
    %v1705 = vshll.u32 %v1631, 16
    %v1707 = vor.u32 %v1704, %v1705
    %v1708 = vsel %vm714, %v1662, %v1707
    %v1710 = vshrl.u32 %v1632, 16
    %v1712 = vrot.slane %v1710, 7
    %v1713 = vshll.u32 %v1632, 16
    %v1715 = vor.u32 %v1712, %v1713
    %v1716 = vsel %vm714, %v1669, %v1715
    %v1718 = vshrl.u32 %v1633, 16
    %v1720 = vrot.slane %v1718, 7
    %v1721 = vshll.u32 %v1633, 16
    %v1723 = vor.u32 %v1720, %v1721
    %v1724 = vsel %vm714, %v1676, %v1723
    %v1726 = vshrl.u32 %v1634, 16
    %v1728 = vrot.slane %v1726, 7
    %v1729 = vshll.u32 %v1634, 16
    %v1731 = vor.u32 %v1728, %v1729
    %v1732 = vsel %vm714, %v1683, %v1731
    %v1733 = vshrl.u32 %v1650, 16
    %v1735 = vrot.slane %v1733, 7
    %v1736 = vshll.u32 %v1650, 16
    %v1738 = vor.u32 %v1735, %v1736
    %v1739 = vsel %vm714, %v1689, %v1738
    %v1752 = vsel %vm816, 0, %v1658
    %v1753 = vsel %vm816, 0, %v1665
    %v1754 = vsel %vm816, 0, %v1672
    %v1755 = vsel %vm816, 0, %v1679
    %v1756 = vsel %vm816, 0, %v1686
    %v1757 = vsel %vm816, 0, %v1692
    %v1758 = vsel %vm845, %v1752, 0
    %v1759 = vsel %vm845, %v1753, 0
    %v1760 = vsel %vm845, %v1754, 0
    %v1761 = vsel %vm845, %v1755, 0
    %v1762 = vsel %vm845, %v1756, 0
    %v1763 = vsel %vm845, %v1757, 0
    %v1764 = vsel %vm846, %v1700, 0
    %v1765 = vsel %vm846, %v1708, 0
    %v1766 = vsel %vm846, %v1716, 0
    %v1767 = vsel %vm846, %v1724, 0
    %v1768 = vsel %vm846, %v1732, 0
    %v1769 = vsel %vm846, %v1739, 0
    %v1770 = vpack.i.b16 %v955, %v955
    %v1772 = vlaneseq
    %v1773 = vshrl.u32 %v1772, 7
    %v1774 = vsub.s32 1, %v1773
    %v1775 = vrot.slane %v1770, %v1774
    %v1776 = vpack.i.b16 %v956, %v956
    %v1778 = vlaneseq
    %v1779 = vshrl.u32 %v1778, 7
    %v1780 = vsub.s32 1, %v1779
    %v1781 = vrot.slane %v1776, %v1780
    %v1782 = vpack.i.b16 %v957, %v957
    %v1784 = vlaneseq
    %v1785 = vshrl.u32 %v1784, 7
    %v1786 = vsub.s32 1, %v1785
    %v1787 = vrot.slane %v1782, %v1786
    %v1788 = vpack.i.b16 %v958, %v958
    %v1790 = vlaneseq
    %v1791 = vshrl.u32 %v1790, 7
    %v1792 = vsub.s32 1, %v1791
    %v1793 = vrot.slane %v1788, %v1792
    %v1794 = vpack.i.b16 %v959, %v959
    %v1796 = vlaneseq
    %v1797 = vshrl.u32 %v1796, 7
    %v1798 = vsub.s32 1, %v1797
    %v1799 = vrot.slane %v1794, %v1798
    %v1800 = vpack.i.b16 %v960, %v960
    %v1802 = vlaneseq
    %v1803 = vshrl.u32 %v1802, 7
    %v1804 = vsub.s32 1, %v1803
    %v1805 = vrot.slane %v1800, %v1804
    %v1806 = vmul.bf16 %v1758, %v1775
    %v1807 = vmul.bf16 %v1759, %v1781
    %v1808 = vmul.bf16 %v1760, %v1787
    %v1809 = vmul.bf16 %v1761, %v1793
    %v1810 = vmul.bf16 %v1762, %v1799
    %v1811 = vmul.bf16 %v1763, %v1805
    %v1812 = vmul.bf16 %v1764, %v1775
    %v1813 = vmul.bf16 %v1765, %v1781
    %v1814 = vmul.bf16 %v1766, %v1787
    %v1815 = vmul.bf16 %v1767, %v1793
    %v1816 = vmul.bf16 %v1768, %v1799
    %v1817 = vmul.bf16 %v1769, %v1805
    %v1818 = vadd.bf16 %v1588, %v1806
    %v1819 = vadd.bf16 %v1589, %v1807
    %v1820 = vadd.bf16 %v1590, %v1808
    %v1821 = vadd.bf16 %v1591, %v1809
    %v1822 = vadd.bf16 %v1592, %v1810
    %v1823 = vadd.bf16 %v1593, %v1811
    %v1824 = vadd.bf16 %v1594, %v1812
    %v1825 = vadd.bf16 %v1595, %v1813
    %v1826 = vadd.bf16 %v1596, %v1814
    %v1827 = vadd.bf16 %v1597, %v1815
    %v1828 = vadd.bf16 %v1598, %v1816
    %v1829 = vadd.bf16 %v1599, %v1817
    %v1830 = vshrl.u32 %v1402, 16
    %v1831 = vpack.i.b16 %v1830, %v1830
    %v1833 = vlaneseq
    %v1834 = vshrl.u32 %v1833, 7
    %v1835 = vsub.s32 2, %v1834
    %v1836 = vrot.slane %v1831, %v1835
    %v1837 = vshrl.u32 %v1403, 16
    %v1838 = vpack.i.b16 %v1837, %v1837
    %v1840 = vlaneseq
    %v1841 = vshrl.u32 %v1840, 7
    %v1842 = vsub.s32 2, %v1841
    %v1843 = vrot.slane %v1838, %v1842
    %v1844 = vshrl.u32 %v1404, 16
    %v1845 = vpack.i.b16 %v1844, %v1844
    %v1847 = vlaneseq
    %v1848 = vshrl.u32 %v1847, 7
    %v1849 = vsub.s32 2, %v1848
    %v1850 = vrot.slane %v1845, %v1849
    %v1851 = vshrl.u32 %v1405, 16
    %v1852 = vpack.i.b16 %v1851, %v1851
    %v1854 = vlaneseq
    %v1855 = vshrl.u32 %v1854, 7
    %v1856 = vsub.s32 2, %v1855
    %v1857 = vrot.slane %v1852, %v1856
    %v1858 = vshrl.u32 %v1406, 16
    %v1859 = vpack.i.b16 %v1858, %v1858
    %v1861 = vlaneseq
    %v1862 = vshrl.u32 %v1861, 7
    %v1863 = vsub.s32 2, %v1862
    %v1864 = vrot.slane %v1859, %v1863
    %v1865 = vshrl.u32 %v1407, 16
    %v1866 = vpack.i.b16 %v1865, %v1865
    %v1868 = vlaneseq
    %v1869 = vshrl.u32 %v1868, 7
    %v1870 = vsub.s32 2, %v1869
    %v1871 = vrot.slane %v1866, %v1870
    %v1872 = vmul.bf16 %v1625, %v1836
    %v1873 = vmul.bf16 %v1626, %v1843
    %v1874 = vmul.bf16 %v1627, %v1850
    %v1875 = vmul.bf16 %v1628, %v1857
    %v1876 = vmul.bf16 %v1629, %v1864
    %v1877 = vmul.bf16 %v1647, %v1871
    %v1878 = vmul.bf16 %v1630, %v1836
    %v1879 = vmul.bf16 %v1631, %v1843
    %v1880 = vmul.bf16 %v1632, %v1850
    %v1881 = vmul.bf16 %v1633, %v1857
    %v1882 = vmul.bf16 %v1634, %v1864
    %v1883 = vmul.bf16 %v1650, %v1871
    %v1884 = vadd.bf16 %v1818, %v1872
    %v1885 = vadd.bf16 %v1819, %v1873
    %v1886 = vadd.bf16 %v1820, %v1874
    %v1887 = vadd.bf16 %v1821, %v1875
    %v1888 = vadd.bf16 %v1822, %v1876
    %v1889 = vadd.bf16 %v1823, %v1877
    %v1890 = vadd.bf16 %v1824, %v1878
    %v1891 = vadd.bf16 %v1825, %v1879
    %v1892 = vadd.bf16 %v1826, %v1880
    %v1893 = vadd.bf16 %v1827, %v1881
    %v1894 = vadd.bf16 %v1828, %v1882
    %v1895 = vadd.bf16 %v1829, %v1883
    %v1896 = vrot.slane %v1656, 1
    %v1897 = vor.u32 %v1653, %v1896
    %v1898 = vrot.slane %v1697, 1
    %v1899 = vsel %vm1033, %v1897, %v1898
    %v1900 = vrot.slane %v1663, 1
    %v1901 = vor.u32 %v1660, %v1900
    %v1902 = vrot.slane %v1705, 1
    %v1903 = vsel %vm1033, %v1901, %v1902
    %v1904 = vrot.slane %v1670, 1
    %v1905 = vor.u32 %v1667, %v1904
    %v1906 = vrot.slane %v1713, 1
    %v1907 = vsel %vm1033, %v1905, %v1906
    %v1908 = vrot.slane %v1677, 1
    %v1909 = vor.u32 %v1674, %v1908
    %v1910 = vrot.slane %v1721, 1
    %v1911 = vsel %vm1033, %v1909, %v1910
    %v1912 = vrot.slane %v1684, 1
    %v1913 = vor.u32 %v1681, %v1912
    %v1914 = vrot.slane %v1729, 1
    %v1915 = vsel %vm1033, %v1913, %v1914
    %v1916 = vrot.slane %v1690, 1
    %v1917 = vor.u32 %v1687, %v1916
    %v1918 = vrot.slane %v1736, 1
    %v1919 = vsel %vm1033, %v1917, %v1918
    %v1920 = vor.u32 %v1694, %v1898
    %v1921 = vor.u32 %v1702, %v1902
    %v1922 = vor.u32 %v1710, %v1906
    %v1923 = vor.u32 %v1718, %v1910
    %v1924 = vor.u32 %v1726, %v1914
    %v1925 = vor.u32 %v1733, %v1918
    %v1938 = vsel %vm1077, %v1920, 0
    %v1939 = vsel %vm1077, %v1921, 0
    %v1940 = vsel %vm1077, %v1922, 0
    %v1941 = vsel %vm1077, %v1923, 0
    %v1942 = vsel %vm1077, %v1924, 0
    %v1943 = vsel %vm1077, %v1925, 0
    %v1944 = vsel %vm1106, %v1899, 0
    %v1945 = vsel %vm1106, %v1903, 0
    %v1946 = vsel %vm1106, %v1907, 0
    %v1947 = vsel %vm1106, %v1911, 0
    %v1948 = vsel %vm1106, %v1915, 0
    %v1949 = vsel %vm1106, %v1919, 0
    %v1950 = vsel %vm1107, %v1938, 0
    %v1951 = vsel %vm1107, %v1939, 0
    %v1952 = vsel %vm1107, %v1940, 0
    %v1953 = vsel %vm1107, %v1941, 0
    %v1954 = vsel %vm1107, %v1942, 0
    %v1955 = vsel %vm1107, %v1943, 0
    %v1956 = vld [vmem:[#allocation2 + $0x18] sm:$0x11]
    %v1957 = vld [vmem:[#allocation2 + $0x20] sm:$0x11]
    %v1958 = vld [vmem:[#allocation2 + $0x28] sm:$0x11]
    %v1962 = vunpack.c.l.b16 %v1956
    %v1963 = vunpack.c.h.b16 %v1956
    %v1964 = vunpack.c.l.b16 %v1957
    %v1965 = vunpack.c.h.b16 %v1957
    %v1966 = vunpack.c.l.b16 %v1958
    %v1967 = vunpack.c.h.b16 %v1958
    %v1968 = vpack.c.b16 %v1962, %v1962
    %v1969 = vpack.c.b16 %v1963, %v1963
    %v1970 = vpack.c.b16 %v1964, %v1964
    %v1971 = vpack.c.b16 %v1965, %v1965
    %v1972 = vpack.c.b16 %v1966, %v1966
    %v1973 = vpack.c.b16 %v1967, %v1967
    %v1975 = vpack.i.b16 %v1968, %v1968
    %v1977 = vlaneseq
    %v1978 = vshrl.u32 %v1977, 7
    %v1979 = vsub.s32 0, %v1978
    %v1980 = vrot.slane %v1975, %v1979
    %v1982 = vpack.i.b16 %v1969, %v1969
    %v1984 = vlaneseq
    %v1985 = vshrl.u32 %v1984, 7
    %v1986 = vsub.s32 0, %v1985
    %v1987 = vrot.slane %v1982, %v1986
    %v1989 = vpack.i.b16 %v1970, %v1970
    %v1991 = vlaneseq
    %v1992 = vshrl.u32 %v1991, 7
    %v1993 = vsub.s32 0, %v1992
    %v1994 = vrot.slane %v1989, %v1993
    %v1996 = vpack.i.b16 %v1971, %v1971
    %v1998 = vlaneseq
    %v1999 = vshrl.u32 %v1998, 7
    %v2000 = vsub.s32 0, %v1999
    %v2001 = vrot.slane %v1996, %v2000
    %v2003 = vpack.i.b16 %v1972, %v1972
    %v2005 = vlaneseq
    %v2006 = vshrl.u32 %v2005, 7
    %v2007 = vsub.s32 0, %v2006
    %v2008 = vrot.slane %v2003, %v2007
    %v2010 = vpack.i.b16 %v1973, %v1973
    %v2012 = vlaneseq
    %v2013 = vshrl.u32 %v2012, 7
    %v2014 = vsub.s32 0, %v2013
    %v2015 = vrot.slane %v2010, %v2014
    %v2016 = vmul.bf16 %v1944, %v1980
    %v2017 = vmul.bf16 %v1945, %v1987
    %v2018 = vmul.bf16 %v1946, %v1994
    %v2019 = vmul.bf16 %v1947, %v2001
    %v2020 = vmul.bf16 %v1948, %v2008
    %v2021 = vmul.bf16 %v1949, %v2015
    %v2022 = vmul.bf16 %v1950, %v1980
    %v2023 = vmul.bf16 %v1951, %v1987
    %v2024 = vmul.bf16 %v1952, %v1994
    %v2025 = vmul.bf16 %v1953, %v2001
    %v2026 = vmul.bf16 %v1954, %v2008
    %v2027 = vmul.bf16 %v1955, %v2015
    %v2028 = vadd.bf16 %v1884, %v2016
    %v2029 = vadd.bf16 %v1885, %v2017
    %v2030 = vadd.bf16 %v1886, %v2018
    %v2031 = vadd.bf16 %v1887, %v2019
    %v2032 = vadd.bf16 %v1888, %v2020
    %v2033 = vadd.bf16 %v1889, %v2021
    %v2034 = vadd.bf16 %v1890, %v2022
    %v2035 = vadd.bf16 %v1891, %v2023
    %v2036 = vadd.bf16 %v1892, %v2024
    %v2037 = vadd.bf16 %v1893, %v2025
    %v2038 = vadd.bf16 %v1894, %v2026
    %v2039 = vadd.bf16 %v1895, %v2027
    %v2040 = vunpack.c.l.bf16 %v2028
    %v2041 = vunpack.c.l.bf16 %v2029
    %v2042 = vunpack.c.l.bf16 %v2030
    %v2043 = vunpack.c.l.bf16 %v2031
    %v2044 = vunpack.c.l.bf16 %v2032
    %v2045 = vunpack.c.l.bf16 %v2033
    %v2046 = vunpack.c.h.bf16 %v2028
    %v2047 = vunpack.c.h.bf16 %v2029
    %v2048 = vunpack.c.h.bf16 %v2030
    %v2049 = vunpack.c.h.bf16 %v2031
    %v2050 = vunpack.c.h.bf16 %v2032
    %v2051 = vunpack.c.h.bf16 %v2033
    %v2052 = vunpack.c.l.bf16 %v2034
    %v2053 = vunpack.c.l.bf16 %v2035
    %v2054 = vunpack.c.l.bf16 %v2036
    %v2055 = vunpack.c.l.bf16 %v2037
    %v2056 = vunpack.c.l.bf16 %v2038
    %v2057 = vunpack.c.l.bf16 %v2039
    %v2058 = vunpack.c.h.bf16 %v2034
    %v2059 = vunpack.c.h.bf16 %v2035
    %v2060 = vunpack.c.h.bf16 %v2036
    %v2061 = vunpack.c.h.bf16 %v2037
    %v2062 = vunpack.c.h.bf16 %v2038
    %v2063 = vunpack.c.h.bf16 %v2039
    %v2064 = vld [vmem:[%s4] sm:$0x3f]
    %v2066 = vlaneseq
    %v2067 = vshrl.u32 %v2066, 7
    %v2068 = vsub.s32 0, %v2067
    %v2069 = vrot.slane %v2064, %v2068
    %v2070 = vlaneseq
    %v2071 = vshrl.u32 %v2070, 7
    %v2072 = vsub.s32 1, %v2071
    %v2073 = vrot.slane %v2064, %v2072
    %v2074 = vlaneseq
    %v2075 = vshrl.u32 %v2074, 7
    %v2076 = vsub.s32 2, %v2075
    %v2077 = vrot.slane %v2064, %v2076
    %v2078 = vlaneseq
    %v2079 = vshrl.u32 %v2078, 7
    %v2080 = vsub.s32 3, %v2079
    %v2081 = vrot.slane %v2064, %v2080
    %v2082 = vlaneseq
    %v2083 = vshrl.u32 %v2082, 7
    %v2084 = vsub.s32 4, %v2083
    %v2085 = vrot.slane %v2064, %v2084
    %v2086 = vlaneseq
    %v2087 = vshrl.u32 %v2086, 7
    %v2088 = vsub.s32 5, %v2087
    %v2089 = vrot.slane %v2064, %v2088
    %v2096 = vadd.f32 %v2040, %v2069
    %v2097 = vadd.f32 %v2041, %v2073
    %v2098 = vadd.f32 %v2042, %v2077
    %v2099 = vadd.f32 %v2043, %v2081
    %v2100 = vadd.f32 %v2044, %v2085
    %v2101 = vadd.f32 %v2045, %v2089
    %v2102 = vadd.f32 %v2046, %v2069
    %v2103 = vadd.f32 %v2047, %v2073
    %v2104 = vadd.f32 %v2048, %v2077
    %v2105 = vadd.f32 %v2049, %v2081
    %v2106 = vadd.f32 %v2050, %v2085
    %v2107 = vadd.f32 %v2051, %v2089
    %v2108 = vadd.f32 %v2052, %v2069
    %v2109 = vadd.f32 %v2053, %v2073
    %v2110 = vadd.f32 %v2054, %v2077
    %v2111 = vadd.f32 %v2055, %v2081
    %v2112 = vadd.f32 %v2056, %v2085
    %v2113 = vadd.f32 %v2057, %v2089
    %v2114 = vadd.f32 %v2058, %v2069
    %v2115 = vadd.f32 %v2059, %v2073
    %v2116 = vadd.f32 %v2060, %v2077
    %v2117 = vadd.f32 %v2061, %v2081
    %v2118 = vadd.f32 %v2062, %v2085
    %v2119 = vadd.f32 %v2063, %v2089
    %v2120 = vmax.f32 %v2096, 0.0
    %v2121 = vmax.f32 %v2097, 0.0
    %v2122 = vmax.f32 %v2098, 0.0
    %v2123 = vmax.f32 %v2099, 0.0
    %v2124 = vmax.f32 %v2100, 0.0
    %v2125 = vmax.f32 %v2101, 0.0
    %v2126 = vmax.f32 %v2102, 0.0
    %v2127 = vmax.f32 %v2103, 0.0
    %v2128 = vmax.f32 %v2104, 0.0
    %v2129 = vmax.f32 %v2105, 0.0
    %v2130 = vmax.f32 %v2106, 0.0
    %v2131 = vmax.f32 %v2107, 0.0
    %v2132 = vmax.f32 %v2108, 0.0
    %v2133 = vmax.f32 %v2109, 0.0
    %v2134 = vmax.f32 %v2110, 0.0
    %v2135 = vmax.f32 %v2111, 0.0
    %v2136 = vmax.f32 %v2112, 0.0
    %v2137 = vmax.f32 %v2113, 0.0
    %v2138 = vmax.f32 %v2114, 0.0
    %v2139 = vmax.f32 %v2115, 0.0
    %v2140 = vmax.f32 %v2116, 0.0
    %v2141 = vmax.f32 %v2117, 0.0
    %v2142 = vmax.f32 %v2118, 0.0
    %v2143 = vmax.f32 %v2119, 0.0
    %v2144 = vmin.f32 %v2120, 6.0
    %v2145 = vmin.f32 %v2121, 6.0
    %v2146 = vmin.f32 %v2122, 6.0
    %v2147 = vmin.f32 %v2123, 6.0
    %v2148 = vmin.f32 %v2124, 6.0
    %v2149 = vmin.f32 %v2125, 6.0
    %v2150 = vmin.f32 %v2126, 6.0
    %v2151 = vmin.f32 %v2127, 6.0
    %v2152 = vmin.f32 %v2128, 6.0
    %v2153 = vmin.f32 %v2129, 6.0
    %v2154 = vmin.f32 %v2130, 6.0
    %v2155 = vmin.f32 %v2131, 6.0
    %v2156 = vmin.f32 %v2132, 6.0
    %v2157 = vmin.f32 %v2133, 6.0
    %v2158 = vmin.f32 %v2134, 6.0
    %v2159 = vmin.f32 %v2135, 6.0
    %v2160 = vmin.f32 %v2136, 6.0
    %v2161 = vmin.f32 %v2137, 6.0
    %v2162 = vmin.f32 %v2138, 6.0
    %v2163 = vmin.f32 %v2139, 6.0
    %v2164 = vmin.f32 %v2140, 6.0
    %v2165 = vmin.f32 %v2141, 6.0
    %v2166 = vmin.f32 %v2142, 6.0
    %v2167 = vmin.f32 %v2143, 6.0
    %v2168 = vpack.c.bf16 %v2150, %v2144
    %v2169 = vpack.c.bf16 %v2151, %v2145
    %v2170 = vpack.c.bf16 %v2152, %v2146
    %v2171 = vpack.c.bf16 %v2153, %v2147
    %v2172 = vpack.c.bf16 %v2154, %v2148
    %v2173 = vpack.c.bf16 %v2155, %v2149
    %v2174 = vpack.c.bf16 %v2162, %v2156
    %v2175 = vpack.c.bf16 %v2163, %v2157
    %v2176 = vpack.c.bf16 %v2164, %v2158
    %v2177 = vpack.c.bf16 %v2165, %v2159
    %v2178 = vpack.c.bf16 %v2166, %v2160
    %v2179 = vpack.c.bf16 %v2167, %v2161
    %v2180 = vld [vmem:[%s5] sm:$0xf]
    %v2181 = vld [vmem:[%s5 + $0x4] sm:$0xf]
    %v2182 = vld [vmem:[%s5 + $0x8] sm:$0xf]
    %v2183 = vld [vmem:[%s5 + $0xc] sm:$0xf]
    %v2184 = vld [vmem:[%s5 + $0x10] sm:$0xf]
    %v2185 = vld [vmem:[%s5 + $0x14] sm:$0xf]
    %v2186 = vld [vmem:[%s5 + $0x18] sm:$0xf]
    %v2187 = vld [vmem:[%s5 + $0x1c] sm:$0xf]
    %v2188 = vld [vmem:[%s5 + $0x20] sm:$0xf]
    %v2189 = vld [vmem:[%s5 + $0x24] sm:$0xf]
    %v2190 = vld [vmem:[%s5 + $0x28] sm:$0xf]
    %v2191 = vld [vmem:[%s5 + $0x2c] sm:$0xf]
    %v2192 = vld [vmem:[%s5 + $0x30] sm:$0xf]
    %v2193 = vld [vmem:[%s5 + $0x34] sm:$0xf]
    %v2194 = vld [vmem:[%s5 + $0x38] sm:$0xf]
    %v2195 = vld [vmem:[%s5 + $0x3c] sm:$0xf]
    %v2196 = vld [vmem:[%s5 + $0x40] sm:$0xf]
    %v2197 = vld [vmem:[%s5 + $0x44] sm:$0xf]
    %v2198 = vld [vmem:[%s5 + $0x48] sm:$0xf]
    %v2199 = vld [vmem:[%s5 + $0x4c] sm:$0xf]
    %v2200 = vld [vmem:[%s5 + $0x50] sm:$0xf]
    %v2201 = vld [vmem:[%s5 + $0x54] sm:$0xf]
    %v2202 = vld [vmem:[%s5 + $0x58] sm:$0xf]
    %v2203 = vld [vmem:[%s5 + $0x5c] sm:$0xf]
    %v2204 = vld [vmem:[%s5 + $0x60] sm:$0xf]
    %v2205 = vld [vmem:[%s5 + $0x64] sm:$0xf]
    %v2206 = vld [vmem:[%s5 + $0x68] sm:$0xf]
    %v2207 = vld [vmem:[%s5 + $0x6c] sm:$0xf]
    %v2208 = vld [vmem:[%s5 + $0x70] sm:$0xf]
    %v2209 = vld [vmem:[%s5 + $0x74] sm:$0xf]
    %v2210 = vld [vmem:[%s5 + $0x78] sm:$0xf]
    %v2211 = vld [vmem:[%s5 + $0x7c] sm:$0xf]
    %v2212 = vld [vmem:[%s5 + $0x80] sm:$0xf]
    %v2213 = vld [vmem:[%s5 + $0x84] sm:$0xf]
    %v2214 = vld [vmem:[%s5 + $0x88] sm:$0xf]
    %v2215 = vld [vmem:[%s5 + $0x8c] sm:$0xf]
    %v2216 = vld [vmem:[%s5 + $0x90] sm:$0xf]
    %v2217 = vld [vmem:[%s5 + $0x94] sm:$0xf]
    %v2218 = vld [vmem:[%s5 + $0x98] sm:$0xf]
    %v2219 = vld [vmem:[%s5 + $0x9c] sm:$0xf]
    %v2220 = vld [vmem:[%s5 + $0xa0] sm:$0xf]
    %v2221 = vld [vmem:[%s5 + $0xa4] sm:$0xf]
    %v2222 = vld [vmem:[%s5 + $0xa8] sm:$0xf]
    %v2223 = vld [vmem:[%s5 + $0xac] sm:$0xf]
    %v2224 = vld [vmem:[%s5 + $0xb0] sm:$0xf]
    %v2225 = vld [vmem:[%s5 + $0xb4] sm:$0xf]
    %v2226 = vld [vmem:[%s5 + $0xb8] sm:$0xf]
    %v2227 = vld [vmem:[%s5 + $0xbc] sm:$0xf]
    %v2228 = vld [vmem:[%s5 + $0xc0] sm:$0xf]
    %v2229 = vld [vmem:[%s5 + $0xc4] sm:$0xf]
    %v2230 = vld [vmem:[%s5 + $0xc8] sm:$0xf]
    %v2231 = vld [vmem:[%s5 + $0xcc] sm:$0xf]
    %v2232 = vld [vmem:[%s5 + $0xd0] sm:$0xf]
    %v2233 = vld [vmem:[%s5 + $0xd4] sm:$0xf]
    %v2234 = vld [vmem:[%s5 + $0xd8] sm:$0xf]
    %v2235 = vld [vmem:[%s5 + $0xdc] sm:$0xf]
    %v2236 = vld [vmem:[%s5 + $0xe0] sm:$0xf]
    %v2237 = vld [vmem:[%s5 + $0xe4] sm:$0xf]
    %v2238 = vld [vmem:[%s5 + $0xe8] sm:$0xf]
    %v2239 = vld [vmem:[%s5 + $0xec] sm:$0xf]
    %v2240 = vld [vmem:[%s5 + $0xf0] sm:$0xf]
    %v2241 = vld [vmem:[%s5 + $0xf4] sm:$0xf]
    %v2242 = vld [vmem:[%s5 + $0xf8] sm:$0xf]
    %v2243 = vld [vmem:[%s5 + $0xfc] sm:$0xf]
    %v2244 = vld [vmem:[%s5 + $0x100] sm:$0xf]
    %v2245 = vld [vmem:[%s5 + $0x104] sm:$0xf]
    %v2246 = vld [vmem:[%s5 + $0x108] sm:$0xf]
    %v2247 = vld [vmem:[%s5 + $0x10c] sm:$0xf]
    %v2248 = vld [vmem:[%s5 + $0x110] sm:$0xf]
    %v2249 = vld [vmem:[%s5 + $0x114] sm:$0xf]
    %v2250 = vld [vmem:[%s5 + $0x118] sm:$0xf]
    %v2251 = vld [vmem:[%s5 + $0x11c] sm:$0xf]
    %v2252 = vld [vmem:[%s5 + $0x120] sm:$0xf]
    %v2253 = vld [vmem:[%s5 + $0x124] sm:$0xf]
    %v2254 = vld [vmem:[%s5 + $0x128] sm:$0xf]
    %v2255 = vld [vmem:[%s5 + $0x12c] sm:$0xf]
    %v2256 = vld [vmem:[%s5 + $0x130] sm:$0xf]
    %v2257 = vld [vmem:[%s5 + $0x134] sm:$0xf]
    %v2258 = vld [vmem:[%s5 + $0x138] sm:$0xf]
    %v2259 = vld [vmem:[%s5 + $0x13c] sm:$0xf]
    %v2260 = vld [vmem:[%s5 + $0x140] sm:$0xf]
    %v2261 = vld [vmem:[%s5 + $0x144] sm:$0xf]
    %v2262 = vld [vmem:[%s5 + $0x148] sm:$0xf]
    %v2263 = vld [vmem:[%s5 + $0x14c] sm:$0xf]
    %v2264 = vld [vmem:[%s5 + $0x150] sm:$0xf]
    %v2265 = vld [vmem:[%s5 + $0x154] sm:$0xf]
    %v2266 = vld [vmem:[%s5 + $0x158] sm:$0xf]
    %v2267 = vld [vmem:[%s5 + $0x15c] sm:$0xf]
    %v2268 = vld [vmem:[%s5 + $0x160] sm:$0xf]
    %v2269 = vld [vmem:[%s5 + $0x164] sm:$0xf]
    %v2270 = vld [vmem:[%s5 + $0x168] sm:$0xf]
    %v2271 = vld [vmem:[%s5 + $0x16c] sm:$0xf]
    %v2272 = vld [vmem:[%s5 + $0x170] sm:$0xf]
    %v2273 = vld [vmem:[%s5 + $0x174] sm:$0xf]
    %v2274 = vld [vmem:[%s5 + $0x178] sm:$0xf]
    %v2275 = vld [vmem:[%s5 + $0x17c] sm:$0xf]
    %v2276 = vld [vmem:[%s6] sm:$0x1]
    %v2278 = vlaneseq
    %v2279 = vshrl.u32 %v2278, 7
    %v2280 = vsub.s32 0, %v2279
    %v2281 = vrot.slane %v2276, %v2280
    %v2379 = vunpack.c.l.b16 %v2180
    %v2380 = vunpack.c.l.b16 %v2181
    %v2381 = vunpack.c.l.b16 %v2182
    %v2382 = vunpack.c.l.b16 %v2183
    %v2383 = vunpack.c.l.b16 %v2184
    %v2384 = vunpack.c.l.b16 %v2185
    %v2385 = vunpack.c.l.b16 %v2186
    %v2386 = vunpack.c.l.b16 %v2187
    %v2387 = vunpack.c.l.b16 %v2188
    %v2388 = vunpack.c.l.b16 %v2189
    %v2389 = vunpack.c.l.b16 %v2190
    %v2390 = vunpack.c.l.b16 %v2191
    %v2391 = vunpack.c.l.b16 %v2192
    %v2392 = vunpack.c.l.b16 %v2193
    %v2393 = vunpack.c.l.b16 %v2194
    %v2394 = vunpack.c.l.b16 %v2195
    %v2395 = vunpack.c.l.b16 %v2196
    %v2396 = vunpack.c.l.b16 %v2197
    %v2397 = vunpack.c.l.b16 %v2198
    %v2398 = vunpack.c.l.b16 %v2199
    %v2399 = vunpack.c.l.b16 %v2200
    %v2400 = vunpack.c.l.b16 %v2201
    %v2401 = vunpack.c.l.b16 %v2202
    %v2402 = vunpack.c.l.b16 %v2203
    %v2403 = vunpack.c.l.b16 %v2204
    %v2404 = vunpack.c.l.b16 %v2205
    %v2405 = vunpack.c.l.b16 %v2206
    %v2406 = vunpack.c.l.b16 %v2207
    %v2407 = vunpack.c.l.b16 %v2208
    %v2408 = vunpack.c.l.b16 %v2209
    %v2409 = vunpack.c.l.b16 %v2210
    %v2410 = vunpack.c.l.b16 %v2211
    %v2411 = vunpack.c.l.b16 %v2212
    %v2412 = vunpack.c.l.b16 %v2213
    %v2413 = vunpack.c.l.b16 %v2214
    %v2414 = vunpack.c.l.b16 %v2215
    %v2415 = vunpack.c.l.b16 %v2216
    %v2416 = vunpack.c.l.b16 %v2217
    %v2417 = vunpack.c.l.b16 %v2218
    %v2418 = vunpack.c.l.b16 %v2219
    %v2419 = vunpack.c.l.b16 %v2220
    %v2420 = vunpack.c.l.b16 %v2221
    %v2421 = vunpack.c.l.b16 %v2222
    %v2422 = vunpack.c.l.b16 %v2223
    %v2423 = vunpack.c.l.b16 %v2224
    %v2424 = vunpack.c.l.b16 %v2225
    %v2425 = vunpack.c.l.b16 %v2226
    %v2426 = vunpack.c.l.b16 %v2227
    %v2427 = vunpack.c.l.b16 %v2228
    %v2428 = vunpack.c.l.b16 %v2229
    %v2429 = vunpack.c.l.b16 %v2230
    %v2430 = vunpack.c.l.b16 %v2231
    %v2431 = vunpack.c.l.b16 %v2232
    %v2432 = vunpack.c.l.b16 %v2233
    %v2433 = vunpack.c.l.b16 %v2234
    %v2434 = vunpack.c.l.b16 %v2235
    %v2435 = vunpack.c.l.b16 %v2236
    %v2436 = vunpack.c.l.b16 %v2237
    %v2437 = vunpack.c.l.b16 %v2238
    %v2438 = vunpack.c.l.b16 %v2239
    %v2439 = vunpack.c.l.b16 %v2240
    %v2440 = vunpack.c.l.b16 %v2241
    %v2441 = vunpack.c.l.b16 %v2242
    %v2442 = vunpack.c.l.b16 %v2243
    %v2443 = vunpack.c.l.b16 %v2244
    %v2444 = vunpack.c.l.b16 %v2245
    %v2445 = vunpack.c.l.b16 %v2246
    %v2446 = vunpack.c.l.b16 %v2247
    %v2447 = vunpack.c.l.b16 %v2248
    %v2448 = vunpack.c.l.b16 %v2249
    %v2449 = vunpack.c.l.b16 %v2250
    %v2450 = vunpack.c.l.b16 %v2251
    %v2451 = vunpack.c.l.b16 %v2252
    %v2452 = vunpack.c.l.b16 %v2253
    %v2453 = vunpack.c.l.b16 %v2254
    %v2454 = vunpack.c.l.b16 %v2255
    %v2455 = vunpack.c.l.b16 %v2256
    %v2456 = vunpack.c.l.b16 %v2257
    %v2457 = vunpack.c.l.b16 %v2258
    %v2458 = vunpack.c.l.b16 %v2259
    %v2459 = vunpack.c.l.b16 %v2260
    %v2460 = vunpack.c.l.b16 %v2261
    %v2461 = vunpack.c.l.b16 %v2262
    %v2462 = vunpack.c.l.b16 %v2263
    %v2463 = vunpack.c.l.b16 %v2264
    %v2464 = vunpack.c.l.b16 %v2265
    %v2465 = vunpack.c.l.b16 %v2266
    %v2466 = vunpack.c.l.b16 %v2267
    %v2467 = vunpack.c.l.b16 %v2268
    %v2468 = vunpack.c.l.b16 %v2269
    %v2469 = vunpack.c.l.b16 %v2270
    %v2470 = vunpack.c.l.b16 %v2271
    %v2471 = vunpack.c.l.b16 %v2272
    %v2472 = vunpack.c.l.b16 %v2273
    %v2473 = vunpack.c.l.b16 %v2274
    %v2474 = vunpack.c.l.b16 %v2275
    %v2475 = vpack.c.b16 %v2380, %v2379
    %v2476 = vpack.c.b16 %v2382, %v2381
    %v2477 = vpack.c.b16 %v2384, %v2383
    %v2478 = vpack.c.b16 %v2386, %v2385
    %v2479 = vpack.c.b16 %v2388, %v2387
    %v2480 = vpack.c.b16 %v2390, %v2389
    %v2481 = vpack.c.b16 %v2392, %v2391
    %v2482 = vpack.c.b16 %v2394, %v2393
    %v2483 = vpack.c.b16 %v2396, %v2395
    %v2484 = vpack.c.b16 %v2398, %v2397
    %v2485 = vpack.c.b16 %v2400, %v2399
    %v2486 = vpack.c.b16 %v2402, %v2401
    %v2487 = vpack.c.b16 %v2404, %v2403
    %v2488 = vpack.c.b16 %v2406, %v2405
    %v2489 = vpack.c.b16 %v2408, %v2407
    %v2490 = vpack.c.b16 %v2410, %v2409
    %v2491 = vpack.c.b16 %v2412, %v2411
    %v2492 = vpack.c.b16 %v2414, %v2413
    %v2493 = vpack.c.b16 %v2416, %v2415
    %v2494 = vpack.c.b16 %v2418, %v2417
    %v2495 = vpack.c.b16 %v2420, %v2419
    %v2496 = vpack.c.b16 %v2422, %v2421
    %v2497 = vpack.c.b16 %v2424, %v2423
    %v2498 = vpack.c.b16 %v2426, %v2425
    %v2499 = vpack.c.b16 %v2428, %v2427
    %v2500 = vpack.c.b16 %v2430, %v2429
    %v2501 = vpack.c.b16 %v2432, %v2431
    %v2502 = vpack.c.b16 %v2434, %v2433
    %v2503 = vpack.c.b16 %v2436, %v2435
    %v2504 = vpack.c.b16 %v2438, %v2437
    %v2505 = vpack.c.b16 %v2440, %v2439
    %v2506 = vpack.c.b16 %v2442, %v2441
    %v2507 = vpack.c.b16 %v2444, %v2443
    %v2508 = vpack.c.b16 %v2446, %v2445
    %v2509 = vpack.c.b16 %v2448, %v2447
    %v2510 = vpack.c.b16 %v2450, %v2449
    %v2511 = vpack.c.b16 %v2452, %v2451
    %v2512 = vpack.c.b16 %v2454, %v2453
    %v2513 = vpack.c.b16 %v2456, %v2455
    %v2514 = vpack.c.b16 %v2458, %v2457
    %v2515 = vpack.c.b16 %v2460, %v2459
    %v2516 = vpack.c.b16 %v2462, %v2461
    %v2517 = vpack.c.b16 %v2464, %v2463
    %v2518 = vpack.c.b16 %v2466, %v2465
    %v2519 = vpack.c.b16 %v2468, %v2467
    %v2520 = vpack.c.b16 %v2470, %v2469
    %v2521 = vpack.c.b16 %v2472, %v2471
    %v2522 = vpack.c.b16 %v2474, %v2473
    %2571 = vmatprep.subr.bf16.mxu0 0
    %2572 = vmatpush1.bf16.msra.mxu0 %v2475
    %2573 = vmatprep.subr.bf16.mxu0 0
    %2574 = vmatpush1.bf16.msra.mxu0 %v2476
    %2575 = vmatprep.subr.bf16.mxu0 0
    %2576 = vmatpush1.bf16.msra.mxu0 %v2477
    %2577 = vmatprep.subr.bf16.mxu0 0
    %2578 = vmatpush1.bf16.msra.mxu0 %v2478
    %2579 = vmatprep.subr.bf16.mxu0 0
    %2580 = vmatpush1.bf16.msra.mxu0 %v2479
    %2581 = vmatprep.subr.bf16.mxu0 0
    %2582 = vmatpush1.bf16.msra.mxu0 %v2480
    %2583 = vmatprep.subr.bf16.mxu0 0
    %2584 = vmatpush1.bf16.msra.mxu0 %v2481
    %2585 = vmatprep.subr.bf16.mxu0 0
    %2586 = vmatpush1.bf16.msra.mxu0 %v2482
    %2587 = vmatprep.subr.bf16.mxu0 0
    %2588 = vmatpush1.bf16.msra.mxu0 %v2483
    %2589 = vmatprep.subr.bf16.mxu0 0
    %2590 = vmatpush1.bf16.msra.mxu0 %v2484
    %2591 = vmatprep.subr.bf16.mxu0 0
    %2592 = vmatpush1.bf16.msra.mxu0 %v2485
    %2593 = vmatprep.subr.bf16.mxu0 0
    %2594 = vmatpush1.bf16.msra.mxu0 %v2486
    %2595 = vmatprep.subr.bf16.mxu0 0
    %2596 = vmatpush1.bf16.msra.mxu0 %v2487
    %2597 = vmatprep.subr.bf16.mxu0 0
    %2598 = vmatpush1.bf16.msra.mxu0 %v2488
    %2599 = vmatprep.subr.bf16.mxu0 0
    %2600 = vmatpush1.bf16.msra.mxu0 %v2489
    %2601 = vmatprep.subr.bf16.mxu0 0
    %2602 = vmatpush1.bf16.msra.mxu0 %v2490
    %2603 = vmatprep.mubr.bf16.mxu0 %v2169
    %2604 = vmatmul.mubr.bf16.gmra.mrb[0].mxu0 %v2168
    %v2605 = vpop.f32.mrb[0].mxu0
    %v2606 = vadd.f32 %v2281, %v2605
    %v2607 = vpop.f32.mrb[0].mxu0
    %v2608 = vpop.f32.mrb[0].mxu0
    %v2609 = vadd.f32 %v2281, %v2608
    %v2610 = vpop.f32.mrb[0].mxu0
    %2611 = vmatprep.mubr.bf16.mxu0 %v2175
    %2612 = vmatmul.mubr.bf16.gmra.mrb[0].mxu0 %v2174
    %v2613 = vpop.f32.mrb[0].mxu0
    %v2614 = vadd.f32 %v2281, %v2613
    %v2615 = vpop.f32.mrb[0].mxu0
    %v2616 = vpop.f32.mrb[0].mxu0
    %v2617 = vadd.f32 %v2281, %v2616
    %v2618 = vpop.f32.mrb[0].mxu0
    %2619 = vdwg.mxu0
    %2620 = vmatprep.subr.bf16.mxu0 0
    %2621 = vmatpush1.bf16.msra.mxu0 %v2491
    %2622 = vmatprep.subr.bf16.mxu0 0
    %2623 = vmatpush1.bf16.msra.mxu0 %v2492
    %2624 = vmatprep.subr.bf16.mxu0 0
    %2625 = vmatpush1.bf16.msra.mxu0 %v2493
    %2626 = vmatprep.subr.bf16.mxu0 0
    %2627 = vmatpush1.bf16.msra.mxu0 %v2494
    %2628 = vmatprep.subr.bf16.mxu0 0
    %2629 = vmatpush1.bf16.msra.mxu0 %v2495
    %2630 = vmatprep.subr.bf16.mxu0 0
    %2631 = vmatpush1.bf16.msra.mxu0 %v2496
    %2632 = vmatprep.subr.bf16.mxu0 0
    %2633 = vmatpush1.bf16.msra.mxu0 %v2497
    %2634 = vmatprep.subr.bf16.mxu0 0
    %2635 = vmatpush1.bf16.msra.mxu0 %v2498
    %2636 = vmatprep.subr.bf16.mxu0 0
    %2637 = vmatpush1.bf16.msra.mxu0 %v2499
    %2638 = vmatprep.subr.bf16.mxu0 0
    %2639 = vmatpush1.bf16.msra.mxu0 %v2500
    %2640 = vmatprep.subr.bf16.mxu0 0
    %2641 = vmatpush1.bf16.msra.mxu0 %v2501
    %2642 = vmatprep.subr.bf16.mxu0 0
    %2643 = vmatpush1.bf16.msra.mxu0 %v2502
    %2644 = vmatprep.subr.bf16.mxu0 0
    %2645 = vmatpush1.bf16.msra.mxu0 %v2503
    %2646 = vmatprep.subr.bf16.mxu0 0
    %2647 = vmatpush1.bf16.msra.mxu0 %v2504
    %2648 = vmatprep.subr.bf16.mxu0 0
    %2649 = vmatpush1.bf16.msra.mxu0 %v2505
    %2650 = vmatprep.subr.bf16.mxu0 0
    %2651 = vmatpush1.bf16.msra.mxu0 %v2506
    %2652 = vmatprep.mubr.bf16.mxu0 %v2171
    %2653 = vmatmul.mubr.bf16.gmra.mrb[0].mxu0 %v2170
    %v2654 = vpop.f32.mrb[0].mxu0
    %v2655 = vadd.f32 %v2606, %v2654
    %v2656 = vpop.f32.mrb[0].mxu0
    %v2657 = vpop.f32.mrb[0].mxu0
    %v2658 = vadd.f32 %v2609, %v2657
    %v2659 = vpop.f32.mrb[0].mxu0
    %2660 = vmatprep.mubr.bf16.mxu0 %v2177
    %2661 = vmatmul.mubr.bf16.gmra.mrb[0].mxu0 %v2176
    %v2662 = vpop.f32.mrb[0].mxu0
    %v2663 = vadd.f32 %v2614, %v2662
    %v2664 = vpop.f32.mrb[0].mxu0
    %v2665 = vpop.f32.mrb[0].mxu0
    %v2666 = vadd.f32 %v2617, %v2665
    %v2667 = vpop.f32.mrb[0].mxu0
    %2668 = vdwg.mxu0
    %2669 = vmatprep.subr.bf16.mxu0 0
    %2670 = vmatpush1.bf16.msra.mxu0 %v2507
    %2671 = vmatprep.subr.bf16.mxu0 0
    %2672 = vmatpush1.bf16.msra.mxu0 %v2508
    %2673 = vmatprep.subr.bf16.mxu0 0
    %2674 = vmatpush1.bf16.msra.mxu0 %v2509
    %2675 = vmatprep.subr.bf16.mxu0 0
    %2676 = vmatpush1.bf16.msra.mxu0 %v2510
    %2677 = vmatprep.subr.bf16.mxu0 0
    %2678 = vmatpush1.bf16.msra.mxu0 %v2511
    %2679 = vmatprep.subr.bf16.mxu0 0
    %2680 = vmatpush1.bf16.msra.mxu0 %v2512
    %2681 = vmatprep.subr.bf16.mxu0 0
    %2682 = vmatpush1.bf16.msra.mxu0 %v2513
    %2683 = vmatprep.subr.bf16.mxu0 0
    %2684 = vmatpush1.bf16.msra.mxu0 %v2514
    %2685 = vmatprep.subr.bf16.mxu0 0
    %2686 = vmatpush1.bf16.msra.mxu0 %v2515
    %2687 = vmatprep.subr.bf16.mxu0 0
    %2688 = vmatpush1.bf16.msra.mxu0 %v2516
    %2689 = vmatprep.subr.bf16.mxu0 0
    %2690 = vmatpush1.bf16.msra.mxu0 %v2517
    %2691 = vmatprep.subr.bf16.mxu0 0
    %2692 = vmatpush1.bf16.msra.mxu0 %v2518
    %2693 = vmatprep.subr.bf16.mxu0 0
    %2694 = vmatpush1.bf16.msra.mxu0 %v2519
    %2695 = vmatprep.subr.bf16.mxu0 0
    %2696 = vmatpush1.bf16.msra.mxu0 %v2520
    %2697 = vmatprep.subr.bf16.mxu0 0
    %2698 = vmatpush1.bf16.msra.mxu0 %v2521
    %2699 = vmatprep.subr.bf16.mxu0 0
    %2700 = vmatpush1.bf16.msra.mxu0 %v2522
    %2701 = vmatprep.mubr.bf16.mxu0 %v2173
    %2702 = vmatmul.mubr.bf16.gmra.mrb[0].mxu0 %v2172
    %v2703 = vpop.f32.mrb[0].mxu0
    %v2704 = vadd.f32 %v2655, %v2703
    %v2705 = vpop.f32.mrb[0].mxu0
    %v2706 = vpop.f32.mrb[0].mxu0
    %v2707 = vadd.f32 %v2658, %v2706
    %v2708 = vpop.f32.mrb[0].mxu0
    %2709 = vmatprep.mubr.bf16.mxu0 %v2179
    %2710 = vmatmul.mubr.bf16.gmra.mrb[0].mxu0 %v2178
    %v2711 = vpop.f32.mrb[0].mxu0
    %v2712 = vadd.f32 %v2663, %v2711
    %v2713 = vpop.f32.mrb[0].mxu0
    %v2714 = vpop.f32.mrb[0].mxu0
    %v2715 = vadd.f32 %v2666, %v2714
    %v2716 = vpop.f32.mrb[0].mxu0
    %2717 = vdwg.mxu0
    %v2718 = vadd.f32 %v2704, %v43
    %v2719 = vadd.f32 %v2707, %v44
    %v2720 = vadd.f32 %v2712, %v45
    %v2721 = vadd.f32 %v2715, %v46
    %2722 = vst [vmem:[%s7] sm:$0xff] %v2718
    %2723 = vst [vmem:[%s7 + $0x8] sm:$0xff] %v2719
    %2724 = vst [vmem:[%s7 + $0x10] sm:$0xff] %v2720
    %2725 = vst [vmem:[%s7 + $0x18] sm:$0xff] %v2721
    // Predicated region
    $region34: #{inverted_residual_forward.1} parent=1 // pred_check
      _
    $region35: #{inverted_residual_forward.1} parent=1 // pred_check_branch
      %2727 = sbr.rel (0) target = $region37
    $region36: #{inverted_residual_forward.1} parent=1 // pred_region
      _
    $region37: #{inverted_residual_forward.1} parent=1 // pred_fallthru
      _
    // Predicated region
    $region38: #{inverted_residual_forward.1} parent=1 // pred_check
      _
    $region39: #{inverted_residual_forward.1} parent=1 // pred_check_branch
      %2729 = sbr.rel (0) target = $region41
    $region40: #{inverted_residual_forward.1} parent=1 // pred_region
      _
    $region41: #{inverted_residual_forward.1} parent=1 // pred_fallthru
      _
    %2730 = vsyncpa [#allocation3], 1

</llo_original>
